<compile_context>
chip_gen: v7x
topology: tpu7x:2x2x1
jax: 0.10.0
libtpu: 0.0.40
codegen_flags: <defaults>
</compile_context>

<pallas_src>
import jax
import jax.numpy as jnp
from jax.experimental import pallas as pl
from jax.experimental.pallas import tpu as pltpu


def _round_up(x, m):
    return ((x + m - 1) // m) * m


def _vmem_capacity_bytes():
    try:
        return int(pltpu.get_tpu_info().vmem_capacity_bytes)
    except Exception:
        return 64 * 1024 * 1024  # conservative (v7x per-TC physical VMEM)


# ----------------------------- Pallas kernel ---------------------------------
def pooling_classifier_kernel(x_ref, wa_ref, wc_ref, bc_ref, out_ref,
                              m_sc, l_sc, acc_sc):
    """AttentionPooling (online softmax over S) + ClassificationHead.

    x_ref  : (TB, TS, E) bf16 token-embedding tile (out_biot tile)
    wa_ref : (1, E)      f32 attention linear weight (nn.Linear(E,1).weight)
    wc_ref : (E, CP)     bf16 classifier weight, padded to lane-dense CP (=128k)
    bc_ref : (1, CP)     f32 classifier bias, padded
    out_ref: (TB, CP)    f32 logits (padded; wrapper slices back to C)
    m_sc   : (TB, 1, 1)  f32 running max        (online softmax)
    l_sc   : (TB, 1, 1)  f32 running denominator
    acc_sc : (TB, 1, E)  f32 running weighted sum
    """
    si = pl.program_id(1)

    @pl.when(si == 0)
    def _():
        m_sc[...] = jnp.full_like(m_sc, -jnp.inf)
        l_sc[...] = jnp.zeros_like(l_sc)
        acc_sc[...] = jnp.zeros_like(acc_sc)

    xf = x_ref[...].astype(jnp.float32)                       # (TB, TS, E)
    tb, ts, e = xf.shape

    # Attention scores: VPU multiply + lane reduce (no TB degenerate N=1 MXU matmuls).
    # The nn.Linear(E,1) bias is omitted: softmax over S is shift-invariant.
    wa3 = wa_ref[...].astype(jnp.float32).reshape(1, 1, e)    # (1, 1, E)
    scores = jnp.sum(xf * wa3, axis=-1, keepdims=True)        # (TB, TS, 1) f32

    # Online softmax over the token axis (torch softmax dim=1).
    m_prev = m_sc[...]
    m_new = jnp.maximum(m_prev, jnp.max(scores, axis=1, keepdims=True))
    alpha = jnp.exp(m_prev - m_new)                           # (TB, 1, 1)
    p = jnp.exp(scores - m_new)                               # (TB, TS, 1)
    l_sc[...] = alpha * l_sc[...] + jnp.sum(p, axis=1, keepdims=True)
    # Weighted pooled sum: VPU multiply + sublane reduce, f32 accumulation
    # (x tile is VMEM-resident; keeps the MXU/vext slot free).
    acc_sc[...] = alpha * acc_sc[...] + jnp.sum(p * xf, axis=1, keepdims=True)
    m_sc[...] = m_new

    @pl.when(si == pl.num_programs(1) - 1)
    def _():
        inv_l = pl.reciprocal(l_sc[...], approx=True)         # EUP slot, ~free
        pooled = (acc_sc[...] * inv_l).reshape(tb, e)         # (TB, E) f32
        # ELU(alpha=1): forward-only select; exp(x)-1 has a guaranteed Mosaic lowering.
        act = jnp.where(pooled > 0, pooled, jnp.exp(pooled) - 1.0)
        logits = jnp.dot(act.astype(wc_ref.dtype), wc_ref[...],
                         preferred_element_type=jnp.float32) + bc_ref[...]
        out_ref[...] = logits.astype(out_ref.dtype)


# ------------------------------ Tile selection --------------------------------
def _pick_tile_s(S, max_tile_s=512):
    """Largest bf16-sublane-aligned (multiple of 16) divisor of S, capped; else full S."""
    if S <= max_tile_s:
        return S
    for ts in range(max_tile_s - max_tile_s % 16, 15, -16):
        if S % ts == 0:
            return ts
    return S  # TODO(synk): ragged S handling (masked last token block)


def _pick_tile_b(B, tile_s, E, CP, vmem_limit):
    """Biggest sublane-aligned batch tile whose full working set fits the VMEM budget."""
    budget = (vmem_limit * 3) // 4                       # headroom for compiler scratch
    const = 2 * (E * CP * 2 + E * 4 + CP * 4)            # double-buffered wc / wa / bc
    # Per batch-row: double-buffered bf16 x tile, f32 copy + f32 product temp,
    # scores/p temps, m/l/acc scratch, double-buffered f32 output row.
    per_row = (2 * tile_s * E * 2) + (2 * tile_s * E * 4) + (4 * tile_s * 4) \
              + ((E + 2) * 4) + (2 * CP * 4)
    max_tb = max(8, ((budget - const) // max(per_row, 1)) // 8 * 8)
    if B % 8 == 0:
        tb = 8
        cand = 8
        while cand <= min(B, max_tb):
            if B % cand == 0:
                tb = cand
            cand += 8
        return tb                                        # divisor of B -> no HBM pad copy
    return int(min(max_tb, _round_up(B, 8)))             # rare fallback (pads batch)


# --------------------------------- Wrapper -------------------------------------
def pooling_classifier(out_biot, wa, ba, wc, bc, *, tile_b=None, tile_s=None):
    """out_biot: (B, S, E); wa: (1,E); ba: (1,) [no-op]; wc: (E,C); bc: (C,)."""
    B, S, E = out_biot.shape
    C = wc.shape[1]
    del ba  # softmax over the token axis is shift-invariant -> bias has no effect
    CP = _round_up(max(C, 128), 128)                     # lane-dense output slab

    vmem_limit = min((_vmem_capacity_bytes() * 3) // 4, 96 * 1024 * 1024)

    if tile_s is None:
        tile_s = _pick_tile_s(S)
    assert tile_s == S or (tile_s % 16 == 0 and S % tile_s == 0), tile_s
    if tile_b is None:
        tile_b = _pick_tile_b(B, tile_s, E, CP, vmem_limit)
    assert tile_b % 8 == 0, "batch tile must be sublane-aligned (multiple of 8)"

    x = out_biot.astype(jnp.bfloat16)
    B_pad = _round_up(B, tile_b)
    if B_pad != B:
        # TODO(synk): masked ragged last batch block instead of this HBM pad copy
        # (only triggers when no sublane-aligned divisor of B fits the VMEM budget).
        x = jnp.pad(x, ((0, B_pad - B), (0, 0), (0, 0)))

    wa_r = wa.reshape(1, E).astype(jnp.float32)
    wc_p = jnp.zeros((E, CP), jnp.bfloat16).at[:, :C].set(wc.astype(jnp.bfloat16))
    bc_p = jnp.zeros((1, CP), jnp.float32).at[:, :C].set(
        bc.reshape(1, C).astype(jnp.float32))

    grid = (B_pad // tile_b, S // tile_s)
    out = pl.pallas_call(
        pooling_classifier_kernel,
        out_shape=jax.ShapeDtypeStruct((B_pad, CP), jnp.float32),
        grid_spec=pltpu.PrefetchScalarGridSpec(
            num_scalar_prefetch=0,
            grid=grid,
            in_specs=[
                pl.BlockSpec((tile_b, tile_s, E), lambda i, j: (i, j, 0)),   # x tile
                pl.BlockSpec((1, E), lambda i, j: (0, 0)),                   # wa
                pl.BlockSpec((E, CP), lambda i, j: (0, 0)),                  # wc
                pl.BlockSpec((1, CP), lambda i, j: (0, 0)),                  # bc
            ],
            out_specs=pl.BlockSpec((tile_b, CP), lambda i, j: (i, 0)),
            scratch_shapes=[
                pltpu.VMEM((tile_b, 1, 1), jnp.float32),   # running max
                pltpu.VMEM((tile_b, 1, 1), jnp.float32),   # running denom
                pltpu.VMEM((tile_b, 1, E), jnp.float32),   # running weighted sum
            ],
        ),
        compiler_params=pltpu.CompilerParams(
            # On v7x, CORE_PARALLEL on the batch axis would split tiles across both TCs.
            dimension_semantics=("parallel", "arbitrary"),
            vmem_limit_bytes=int(vmem_limit),
        ),
    )(x, wa_r, wc_p, bc_p)
    return out[:B, :C]


# ------------------------- Encoder stand-in (glue) ----------------------------
def biot_encoder_standin(x, w_patch, b_patch, emb_size, out_dtype=jnp.bfloat16):
    """Deterministic stand-in for BIOTEncoder: linear patch embedding per channel.

    x: (B, n_channels, T) -> out_biot: (B, n_channels * (T // P), emb_size) bf16.
    """
    B, Cch, T = x.shape
    P = w_patch.shape[0]
    n_p = T // P
    patches = x.reshape(B, Cch, n_p, P)
    tokens = jnp.einsum("bcnp,pe->bcne", patches, w_patch) + b_patch
    return tokens.reshape(B, Cch * n_p, emb_size).astype(out_dtype)


def biot_classifier_forward(x, params, *, tile_b=None, tile_s=None):
    out_biot = biot_encoder_standin(
        x, params["w_patch"], params["b_patch"], params["emb_size"])
    return pooling_classifier(
        out_biot, params["wa"], params["ba"], params["wc"], params["bc"],
        tile_b=tile_b, tile_s=tile_s)


def reference_forward(out_biot, wa, ba, wc, bc):
    """Plain-JAX f32 reference of AttentionPooling + ClassificationHead."""
    xb = out_biot.astype(jnp.float32)
    scores = jnp.einsum("bse,oe->bso", xb, wa.astype(jnp.float32))[..., 0]
    scores = scores + ba.reshape(()).astype(jnp.float32)
    w = jax.nn.softmax(scores, axis=1)                      # softmax over dim=1
    pooled = jnp.sum(xb * w[:, :, None], axis=1)
    act = jnp.where(pooled > 0, pooled, jnp.expm1(pooled))  # ELU(alpha=1)
    return act @ wc.astype(jnp.float32) + bc.reshape(1, -1).astype(jnp.float32)


# ---------------------------------- Main ---------------------------------------
if __name__ == "__main__":
    # Small shapes consistent with BIOTClassifier(emb_size, n_channels, n_classes);
    # emb_size=128 keeps the lane axis dense; S = n_channels * (T // patch_len) = 32.
    B, n_channels, T = 16, 4, 64
    emb_size, n_classes = 128, 1
    patch_len = 8

    key = jax.random.PRNGKey(0)
    k_x, k_wp, k_bp, k_wa, k_ba, k_wc, k_bc = jax.random.split(key, 7)

    x = jax.random.normal(k_x, (B, n_channels, T), dtype=jnp.float32)
    params = {
        "emb_size": emb_size,
        "w_patch": 0.1 * jax.random.normal(k_wp, (patch_len, emb_size), jnp.float32),
        "b_patch": 0.01 * jax.random.normal(k_bp, (emb_size,), jnp.float32),
        # AttentionPooling: nn.Linear(emb_size, 1) -> weight (1, E), bias (1,)
        "wa": 0.1 * jax.random.normal(k_wa, (1, emb_size), jnp.float32),
        "ba": 0.01 * jax.random.normal(k_ba, (1,), jnp.float32),
        # ClassificationHead: nn.Linear(emb_size, n_classes) stored transposed (E,C), bias (C,)
        "wc": 0.1 * jax.random.normal(k_wc, (emb_size, n_classes), jnp.float32),
        "bc": 0.01 * jax.random.normal(k_bc, (n_classes,), jnp.float32),
    }

    out_biot = biot_encoder_standin(
        x, params["w_patch"], params["b_patch"], params["emb_size"])  # (16, 32, 128) bf16

    ref = reference_forward(out_biot, params["wa"], params["ba"],
                            params["wc"], params["bc"])

    # 1) Auto-tiled path (budget-derived tiles; single grid step at these shapes).
    logits = pooling_classifier(out_biot, params["wa"], params["ba"],
                                params["wc"], params["bc"])
    logits = jax.block_until_ready(logits)
    assert logits.shape == (B, n_classes), logits.shape
    assert jnp.allclose(logits, ref, atol=1e-2, rtol=1e-2), (logits, ref)

    # 2) Explicit small tiles: 2 batch tiles x 2 S tiles exercises the pipelined grid
    #    and the online-softmax accumulator across S steps.
    logits2 = jax.block_until_ready(
        pooling_classifier(out_biot, params["wa"], params["ba"],
                           params["wc"], params["bc"], tile_b=8, tile_s=16))
    assert logits2.shape == (B, n_classes), logits2.shape
    assert jnp.allclose(logits2, ref, atol=1e-2, rtol=1e-2), (logits2, ref)

    print("KERNEL_OK")
</pallas_src>

<mosaic_0001>
module attributes {stable_mosaic.version = 11 : i64} {
  func.func @pooling_classifier_kernel(%arg0: i32, %arg1: i32, %arg2: memref<16x32x128xbf16, #tpu.memory_space<vmem>>, %arg3: memref<1x128xf32, #tpu.memory_space<vmem>>, %arg4: memref<128x128xbf16, #tpu.memory_space<vmem>>, %arg5: memref<1x128xf32, #tpu.memory_space<vmem>>, %arg6: memref<16x128xf32, #tpu.memory_space<vmem>>, %arg7: memref<16x1x1xf32, #tpu.memory_space<vmem>>, %arg8: memref<16x1x1xf32, #tpu.memory_space<vmem>>, %arg9: memref<16x1x128xf32, #tpu.memory_space<vmem>>) attributes {dimension_semantics = [#tpu.dimension_semantics<parallel>, #tpu.dimension_semantics<arbitrary>], iteration_bounds = array<i64: 1, 1>, scalar_prefetch = 0 : i64, scratch_operands = 3 : i64, tpu.core_type = #tpu.core_type<tc>, window_params = [{transform_indices = @transform_0, window_bounds = array<i64: 16, 32, 128>}, {pipeline_mode = #tpu.pipeline_mode<synchronous>, transform_indices = @transform_1, window_bounds = array<i64: 1, 128>}, {pipeline_mode = #tpu.pipeline_mode<synchronous>, transform_indices = @transform_2, window_bounds = array<i64: 128, 128>}, {pipeline_mode = #tpu.pipeline_mode<synchronous>, transform_indices = @transform_3, window_bounds = array<i64: 1, 128>}, {transform_indices = @transform_4, window_bounds = array<i64: 16, 128>}]} {
    %c0_i32 = arith.constant 0 : i32
    %0 = arith.cmpi eq, %arg1, %c0_i32 : i32
    %1 = arith.extui %0 : i1 to i32
    %c0_i32_0 = arith.constant 0 : i32
    %2 = arith.cmpi ne, %1, %c0_i32_0 : i32
    scf.if %2 {
      %cst_28 = arith.constant 0xFF800000 : f32
      %39 = vector.broadcast %cst_28 : f32 to vector<16x1x1xf32>
      %c0_29 = arith.constant 0 : index
      %c0_30 = arith.constant 0 : index
      %c0_31 = arith.constant 0 : index
      %40 = vector.load %arg7[%c0_29, %c0_30, %c0_31] : memref<16x1x1xf32, #tpu.memory_space<vmem>>, vector<16x1x1xf32>
      tpu.vector_store %arg7[%c0_29, %c0_30, %c0_31], %39 {strides = array<i32>} : memref<16x1x1xf32, #tpu.memory_space<vmem>>, vector<16x1x1xf32>,
      %cst_32 = arith.constant 0.000000e+00 : f32
      %41 = vector.broadcast %cst_32 : f32 to vector<16x1x1xf32>
      %c0_33 = arith.constant 0 : index
      %c0_34 = arith.constant 0 : index
      %c0_35 = arith.constant 0 : index
      %42 = vector.load %arg8[%c0_33, %c0_34, %c0_35] : memref<16x1x1xf32, #tpu.memory_space<vmem>>, vector<16x1x1xf32>
      tpu.vector_store %arg8[%c0_33, %c0_34, %c0_35], %41 {strides = array<i32>} : memref<16x1x1xf32, #tpu.memory_space<vmem>>, vector<16x1x1xf32>,
      %cst_36 = arith.constant 0.000000e+00 : f32
      %43 = vector.broadcast %cst_36 : f32 to vector<16x1x128xf32>
      %c0_37 = arith.constant 0 : index
      %c0_38 = arith.constant 0 : index
      %c0_39 = arith.constant 0 : index
      %44 = vector.load %arg9[%c0_37, %c0_38, %c0_39] : memref<16x1x128xf32, #tpu.memory_space<vmem>>, vector<16x1x128xf32>
      tpu.vector_store %arg9[%c0_37, %c0_38, %c0_39], %43 {strides = array<i32>} : memref<16x1x128xf32, #tpu.memory_space<vmem>>, vector<16x1x128xf32>,
    } else {
    }
    %c0 = arith.constant 0 : index
    %c0_1 = arith.constant 0 : index
    %c0_2 = arith.constant 0 : index
    %3 = vector.load %arg2[%c0, %c0_1, %c0_2] : memref<16x32x128xbf16, #tpu.memory_space<vmem>>, vector<16x32x128xbf16>
    %4 = arith.extf %3 : vector<16x32x128xbf16> to vector<16x32x128xf32>
    %c0_3 = arith.constant 0 : index
    %c0_4 = arith.constant 0 : index
    %5 = vector.load %arg3[%c0_3, %c0_4] : memref<1x128xf32, #tpu.memory_space<vmem>>, vector<1x128xf32>
    %6 = vector.shape_cast %5 : vector<1x128xf32> to vector<1x1x128xf32>
    %7 = vector.broadcast %6 : vector<1x1x128xf32> to vector<16x32x128xf32>
    %8 = arith.mulf %4, %7 : vector<16x32x128xf32>
    %cst = arith.constant dense<0.000000e+00> : vector<16x32xf32>
    %9 = vector.multi_reduction <add>, %8, %cst [2] : vector<16x32x128xf32> to vector<16x32xf32>
    %10 = vector.shape_cast %9 : vector<16x32xf32> to vector<16x32x1xf32>
    %c0_5 = arith.constant 0 : index
    %c0_6 = arith.constant 0 : index
    %c0_7 = arith.constant 0 : index
    %11 = vector.load %arg7[%c0_5, %c0_6, %c0_7] : memref<16x1x1xf32, #tpu.memory_space<vmem>>, vector<16x1x1xf32>
    %cst_8 = arith.constant dense<0xFF800000> : vector<16x1xf32>
    %12 = vector.multi_reduction <maximumf>, %10, %cst_8 [1] : vector<16x32x1xf32> to vector<16x1xf32>
    %13 = vector.shape_cast %12 : vector<16x1xf32> to vector<16x1x1xf32>
    %14 = arith.maximumf %11, %13 : vector<16x1x1xf32>
    %15 = arith.subf %11, %14 : vector<16x1x1xf32>
    %16 = math.exp %15 : vector<16x1x1xf32>
    %17 = vector.broadcast %14 : vector<16x1x1xf32> to vector<16x32x1xf32>
    %18 = arith.subf %10, %17 : vector<16x32x1xf32>
    %19 = math.exp %18 : vector<16x32x1xf32>
    %c0_9 = arith.constant 0 : index
    %c0_10 = arith.constant 0 : index
    %c0_11 = arith.constant 0 : index
    %20 = vector.load %arg8[%c0_9, %c0_10, %c0_11] : memref<16x1x1xf32, #tpu.memory_space<vmem>>, vector<16x1x1xf32>
    %21 = arith.mulf %16, %20 : vector<16x1x1xf32>
    %cst_12 = arith.constant dense<0.000000e+00> : vector<16x1xf32>
    %22 = vector.multi_reduction <add>, %19, %cst_12 [1] : vector<16x32x1xf32> to vector<16x1xf32>
    %23 = vector.shape_cast %22 : vector<16x1xf32> to vector<16x1x1xf32>
    %24 = arith.addf %21, %23 : vector<16x1x1xf32>
    %c0_13 = arith.constant 0 : index
    %c0_14 = arith.constant 0 : index
    %c0_15 = arith.constant 0 : index
    %25 = vector.load %arg8[%c0_13, %c0_14, %c0_15] : memref<16x1x1xf32, #tpu.memory_space<vmem>>, vector<16x1x1xf32>
    tpu.vector_store %arg8[%c0_13, %c0_14, %c0_15], %24 {strides = array<i32>} : memref<16x1x1xf32, #tpu.memory_space<vmem>>, vector<16x1x1xf32>,
    %c0_16 = arith.constant 0 : index
    %c0_17 = arith.constant 0 : index
    %c0_18 = arith.constant 0 : index
    %26 = vector.load %arg9[%c0_16, %c0_17, %c0_18] : memref<16x1x128xf32, #tpu.memory_space<vmem>>, vector<16x1x128xf32>
    %27 = vector.broadcast %16 : vector<16x1x1xf32> to vector<16x1x128xf32>
    %28 = arith.mulf %27, %26 : vector<16x1x128xf32>
    %29 = vector.broadcast %19 : vector<16x32x1xf32> to vector<16x32x128xf32>
    %30 = arith.mulf %29, %4 : vector<16x32x128xf32>
    %cst_19 = arith.constant dense<0.000000e+00> : vector<16x128xf32>
    %31 = vector.multi_reduction <add>, %30, %cst_19 [1] : vector<16x32x128xf32> to vector<16x128xf32>
    %32 = vector.shape_cast %31 : vector<16x128xf32> to vector<16x1x128xf32>
    %33 = arith.addf %28, %32 : vector<16x1x128xf32>
    %c0_20 = arith.constant 0 : index
    %c0_21 = arith.constant 0 : index
    %c0_22 = arith.constant 0 : index
    %34 = vector.load %arg9[%c0_20, %c0_21, %c0_22] : memref<16x1x128xf32, #tpu.memory_space<vmem>>, vector<16x1x128xf32>
    tpu.vector_store %arg9[%c0_20, %c0_21, %c0_22], %33 {strides = array<i32>} : memref<16x1x128xf32, #tpu.memory_space<vmem>>, vector<16x1x128xf32>,
    %c0_23 = arith.constant 0 : index
    %c0_24 = arith.constant 0 : index
    %c0_25 = arith.constant 0 : index
    %35 = vector.load %arg7[%c0_23, %c0_24, %c0_25] : memref<16x1x1xf32, #tpu.memory_space<vmem>>, vector<16x1x1xf32>
    tpu.vector_store %arg7[%c0_23, %c0_24, %c0_25], %14 {strides = array<i32>} : memref<16x1x1xf32, #tpu.memory_space<vmem>>, vector<16x1x1xf32>,
    %c0_i32_26 = arith.constant 0 : i32
    %36 = arith.cmpi eq, %arg1, %c0_i32_26 : i32
    %37 = arith.extui %36 : i1 to i32
    %c0_i32_27 = arith.constant 0 : i32
    %38 = arith.cmpi ne, %37, %c0_i32_27 : i32
    scf.if %38 {
      %c0_28 = arith.constant 0 : index
      %c0_29 = arith.constant 0 : index
      %c0_30 = arith.constant 0 : index
      %39 = vector.load %arg8[%c0_28, %c0_29, %c0_30] : memref<16x1x1xf32, #tpu.memory_space<vmem>>, vector<16x1x1xf32>
      %40 = tpu.reciprocal %39 {approx = true} : vector<16x1x1xf32> -> vector<16x1x1xf32>
      %c0_31 = arith.constant 0 : index
      %c0_32 = arith.constant 0 : index
      %c0_33 = arith.constant 0 : index
      %41 = vector.load %arg9[%c0_31, %c0_32, %c0_33] : memref<16x1x128xf32, #tpu.memory_space<vmem>>, vector<16x1x128xf32>
      %42 = vector.broadcast %40 : vector<16x1x1xf32> to vector<16x1x128xf32>
      %43 = arith.mulf %41, %42 : vector<16x1x128xf32>
      %44 = vector.shape_cast %43 : vector<16x1x128xf32> to vector<16x128xf32>
      %cst_34 = arith.constant 0.000000e+00 : f32
      %45 = vector.broadcast %cst_34 : f32 to vector<16x128xf32>
      %46 = arith.cmpf ogt, %44, %45 : vector<16x128xf32>
      %47 = math.exp %44 : vector<16x128xf32>
      %cst_35 = arith.constant 1.000000e+00 : f32
      %48 = vector.broadcast %cst_35 : f32 to vector<16x128xf32>
      %49 = arith.subf %47, %48 : vector<16x128xf32>
      %50 = arith.select %46, %44, %49 : vector<16x128xi1>, vector<16x128xf32>
      %51 = arith.truncf %50 : vector<16x128xf32> to vector<16x128xbf16>
      %c0_36 = arith.constant 0 : index
      %c0_37 = arith.constant 0 : index
      %52 = vector.load %arg4[%c0_36, %c0_37] : memref<128x128xbf16, #tpu.memory_space<vmem>>, vector<128x128xbf16>
      %cst_38 = arith.constant dense<0.000000e+00> : vector<16x128xf32>
      %53 = tpu.matmul %51, %52, %cst_38 {dimension_numbers = #tpu.dot_dimension_numbers<[1], [0], [0], [1], [0, 0, 1, 1], [], []>} : vector<16x128xbf16>, vector<128x128xbf16>, vector<16x128xf32> -> vector<16x128xf32>
      %c0_39 = arith.constant 0 : index
      %c0_40 = arith.constant 0 : index
      %54 = vector.load %arg5[%c0_39, %c0_40] : memref<1x128xf32, #tpu.memory_space<vmem>>, vector<1x128xf32>
      %55 = vector.broadcast %54 : vector<1x128xf32> to vector<16x128xf32>
      %56 = arith.addf %53, %55 : vector<16x128xf32>
      %c0_41 = arith.constant 0 : index
      %c0_42 = arith.constant 0 : index
      %57 = vector.load %arg6[%c0_41, %c0_42] : memref<16x128xf32, #tpu.memory_space<vmem>>, vector<16x128xf32>
      tpu.vector_store %arg6[%c0_41, %c0_42], %56 {strides = array<i32>} : memref<16x128xf32, #tpu.memory_space<vmem>>, vector<16x128xf32>,
    } else {
    }
    return
  }
  func.func @transform_0(%arg0: i32, %arg1: i32) -> (i32, i32, i32) {
    %c0_i32 = arith.constant 0 : i32
    %c0_i32_0 = arith.constant 0 : i32
    return %arg0, %arg1, %c0_i32 : i32, i32, i32
  }
  func.func @transform_1(%arg0: i32, %arg1: i32) -> (i32, i32) {
    %c0_i32 = arith.constant 0 : i32
    %c0_i32_0 = arith.constant 0 : i32
    %c0_i32_1 = arith.constant 0 : i32
    return %c0_i32, %c0_i32_0 : i32, i32
  }
  func.func @transform_2(%arg0: i32, %arg1: i32) -> (i32, i32) {
    %c0_i32 = arith.constant 0 : i32
    %c0_i32_0 = arith.constant 0 : i32
    %c0_i32_1 = arith.constant 0 : i32
    return %c0_i32, %c0_i32_0 : i32, i32
  }
  func.func @transform_3(%arg0: i32, %arg1: i32) -> (i32, i32) {
    %c0_i32 = arith.constant 0 : i32
    %c0_i32_0 = arith.constant 0 : i32
    %c0_i32_1 = arith.constant 0 : i32
    return %c0_i32, %c0_i32_0 : i32, i32
  }
  func.func @transform_4(%arg0: i32, %arg1: i32) -> (i32, i32) {
    %c0_i32 = arith.constant 0 : i32
    %c0_i32_0 = arith.constant 0 : i32
    return %arg0, %c0_i32 : i32, i32
  }
}

</mosaic_0001>

<llo_original>
// kernel: tpu_custom_call.1
$region0: #{tpu_custom_call.1}
  #allocation0 [shape = 'u32[]', space=smem, size = 0x4, offset = 0x4, fixed_abs, tag = 'smem constant byte address 0x4 - core index']
  #allocation1 [shape = 'u32[144,128]{1,0:T(1,128)}', space=vmem, size = 0x12000, scoped, tag = 'internal scratch']
  #allocation2 [shape = 'f32[16,1,1]{2,1,0:T(1,128)}', space=vmem, size = 0x2000, scoped, tag = 'scratch operand']
  #allocation3 [shape = 'f32[16,1,1]{2,1,0:T(1,128)}', space=vmem, size = 0x2000, scoped, tag = 'scratch operand']
  #allocation4 [shape = 'f32[16,1,128]{2,1,0:T(1,128)}', space=vmem, size = 0x2000, scoped, tag = 'scratch operand']
  %s0 = inlined_call_operand.hbm [shape: bf16[16,32,128], index: 0, kind: input, shape index: {}]
  %s1 = inlined_call_operand.vmem [shape: f32[1,128], index: 1, kind: input, shape index: {}]
  %s2 = inlined_call_operand.hbm [shape: bf16[128,128], index: 2, kind: input, shape index: {}]
  %s3 = inlined_call_operand.vmem [shape: f32[1,128], index: 3, kind: input, shape index: {}]
  %s4 = inlined_call_operand.hbm [shape: f32[16,128], index: 4, kind: output, shape index: {}]
  %s5 = sld [smem:[#allocation0]]
  $region42: #{tpu_custom_call.1} parent=0
    _
  %s7 = ssub.s32 1, %s5
  %s8 = scalar_select 0, %s7, %s5
  $region1: #{tpu_custom_call.1} parent=0
    #allocation5 [shape = 'u8[131072]{0}', space=vmem, size = 0x20000, scoped, tag = 'input window, operand 0, single buffered']
    #allocation6 [shape = 's32[1]{0}', space=sflag, size = 0x4, scoped, tag = 'scoped memory for tpu_custom_call.1']
    #allocation7 [shape = 's32[1]{0}', space=sflag, size = 0x4, scoped, tag = 'scoped memory for tpu_custom_call.1']
    #allocation8 [shape = 'u8[32768]{0}', space=vmem, size = 0x8000, scoped, tag = 'input window, operand 2, single buffered']
    #allocation9 [shape = 's32[1]{0}', space=sflag, size = 0x4, scoped, tag = 'scoped memory for tpu_custom_call.1']
    #allocation10 [shape = 'u8[8192]{0}', space=vmem, size = 0x2000, scoped, tag = 'output window, operand 0, single buffered']
    %9 = vsyncpa [#allocation6], 0
    %10 = vsyncpa [#allocation9], 0
    %11 = vsyncpa [#allocation7], 0
    // Predicated region
    $region2: #{tpu_custom_call.1} parent=1 // pred_check
      _
    $region3: #{tpu_custom_call.1} parent=1 // pred_check_branch
      %13 = sbr.rel (0) target = $region5
    $region4: #{tpu_custom_call.1} parent=1 // pred_region
      %s15 = ssub.s32 4096, 4096
      %16 = vsyncadd [#allocation6], %s15
      %s17 = sshll.u32 [#allocation5], 4
      %s18 = int_to_ptr.vmem [resolvable:$true] %s17
      %23 = dma.hbm_to_vmem [thread:$0]  %s0, 4096, %s18, [#allocation6], 64, 64, 4
    $region5: #{tpu_custom_call.1} parent=1 // pred_fallthru
      _
    // Predicated region
    $region6: #{tpu_custom_call.1} parent=1 // pred_check
      _
    $region7: #{tpu_custom_call.1} parent=1 // pred_check_branch
      %25 = sbr.rel (0) target = $region9
    $region8: #{tpu_custom_call.1} parent=1 // pred_region
      _
    $region9: #{tpu_custom_call.1} parent=1 // pred_fallthru
      _
    // Predicated region
    $region10: #{tpu_custom_call.1} parent=1 // pred_check
      _
    $region11: #{tpu_custom_call.1} parent=1 // pred_check_branch
      %27 = sbr.rel (0) target = $region13
    $region12: #{tpu_custom_call.1} parent=1 // pred_region
      %s29 = ssub.s32 1024, 1024
      %30 = vsyncadd [#allocation9], %s29
      %s31 = sshll.u32 [#allocation8], 4
      %s32 = int_to_ptr.vmem [resolvable:$true] %s31
      %37 = dma.hbm_to_vmem [thread:$0]  %s2, 1024, %s32, [#allocation9], 64, 64, 4
    $region13: #{tpu_custom_call.1} parent=1 // pred_fallthru
      _
    // Predicated region
    $region14: #{tpu_custom_call.1} parent=1 // pred_check
      _
    $region15: #{tpu_custom_call.1} parent=1 // pred_check_branch
      %39 = sbr.rel (0) target = $region17
    $region16: #{tpu_custom_call.1} parent=1 // pred_region
      _
    $region17: #{tpu_custom_call.1} parent=1 // pred_fallthru
      _
    // Predicated region
    $region18: #{tpu_custom_call.1} parent=1 // pred_check
      _
    $region19: #{tpu_custom_call.1} parent=1 // pred_check_branch
      %41 = sbr.rel (0) target = $region21
    $region20: #{tpu_custom_call.1} parent=1 // pred_region
      %42 = dma.done [#allocation6], 4096
    $region21: #{tpu_custom_call.1} parent=1 // pred_fallthru
      _
    // Predicated region
    $region22: #{tpu_custom_call.1} parent=1 // pred_check
      _
    $region23: #{tpu_custom_call.1} parent=1 // pred_check_branch
      %44 = sbr.rel (0) target = $region25
    $region24: #{tpu_custom_call.1} parent=1 // pred_region
      %45 = dma.done [#allocation9], 1024
    $region25: #{tpu_custom_call.1} parent=1 // pred_fallthru
      _
    %p47 = scmp.eq.s32.totalorder 0, 0
    // Predicated region
    $region26: #{tpu_custom_call.1} parent=1 // pred_check
      %p48 = pneg %p47
    $region27: #{tpu_custom_call.1} parent=1 // pred_check_branch
      %50 = sbr.rel (%p48) target = $region29
    $region28: #{tpu_custom_call.1} parent=1 // pred_region
      %vm51 = vcmask 0
      %52 = vst.msk [vmem:[#allocation2] sm:$0x1] %vm51, -inf
      %53 = vst.msk [vmem:[#allocation2 + $0x1] sm:$0x1] %vm51, -inf
      %54 = vst.msk [vmem:[#allocation2 + $0x2] sm:$0x1] %vm51, -inf
      %55 = vst.msk [vmem:[#allocation2 + $0x3] sm:$0x1] %vm51, -inf
      %56 = vst.msk [vmem:[#allocation2 + $0x4] sm:$0x1] %vm51, -inf
      %57 = vst.msk [vmem:[#allocation2 + $0x5] sm:$0x1] %vm51, -inf
      %58 = vst.msk [vmem:[#allocation2 + $0x6] sm:$0x1] %vm51, -inf
      %59 = vst.msk [vmem:[#allocation2 + $0x7] sm:$0x1] %vm51, -inf
      %60 = vst.msk [vmem:[#allocation2 + $0x8] sm:$0x1] %vm51, -inf
      %61 = vst.msk [vmem:[#allocation2 + $0x9] sm:$0x1] %vm51, -inf
      %62 = vst.msk [vmem:[#allocation2 + $0xa] sm:$0x1] %vm51, -inf
      %63 = vst.msk [vmem:[#allocation2 + $0xb] sm:$0x1] %vm51, -inf
      %64 = vst.msk [vmem:[#allocation2 + $0xc] sm:$0x1] %vm51, -inf
      %65 = vst.msk [vmem:[#allocation2 + $0xd] sm:$0x1] %vm51, -inf
      %66 = vst.msk [vmem:[#allocation2 + $0xe] sm:$0x1] %vm51, -inf
      %67 = vst.msk [vmem:[#allocation2 + $0xf] sm:$0x1] %vm51, -inf
      %68 = vst.msk [vmem:[#allocation3] sm:$0x1] %vm51, 0.0
      %69 = vst.msk [vmem:[#allocation3 + $0x1] sm:$0x1] %vm51, 0.0
      %70 = vst.msk [vmem:[#allocation3 + $0x2] sm:$0x1] %vm51, 0.0
      %71 = vst.msk [vmem:[#allocation3 + $0x3] sm:$0x1] %vm51, 0.0
      %72 = vst.msk [vmem:[#allocation3 + $0x4] sm:$0x1] %vm51, 0.0
      %73 = vst.msk [vmem:[#allocation3 + $0x5] sm:$0x1] %vm51, 0.0
      %74 = vst.msk [vmem:[#allocation3 + $0x6] sm:$0x1] %vm51, 0.0
      %75 = vst.msk [vmem:[#allocation3 + $0x7] sm:$0x1] %vm51, 0.0
      %76 = vst.msk [vmem:[#allocation3 + $0x8] sm:$0x1] %vm51, 0.0
      %77 = vst.msk [vmem:[#allocation3 + $0x9] sm:$0x1] %vm51, 0.0
      %78 = vst.msk [vmem:[#allocation3 + $0xa] sm:$0x1] %vm51, 0.0
      %79 = vst.msk [vmem:[#allocation3 + $0xb] sm:$0x1] %vm51, 0.0
      %80 = vst.msk [vmem:[#allocation3 + $0xc] sm:$0x1] %vm51, 0.0
      %81 = vst.msk [vmem:[#allocation3 + $0xd] sm:$0x1] %vm51, 0.0
      %82 = vst.msk [vmem:[#allocation3 + $0xe] sm:$0x1] %vm51, 0.0
      %83 = vst.msk [vmem:[#allocation3 + $0xf] sm:$0x1] %vm51, 0.0
      %84 = vst [vmem:[#allocation4] sm:$0x1] 0.0
      %85 = vst [vmem:[#allocation4 + $0x1] sm:$0x1] 0.0
      %86 = vst [vmem:[#allocation4 + $0x2] sm:$0x1] 0.0
      %87 = vst [vmem:[#allocation4 + $0x3] sm:$0x1] 0.0
      %88 = vst [vmem:[#allocation4 + $0x4] sm:$0x1] 0.0
      %89 = vst [vmem:[#allocation4 + $0x5] sm:$0x1] 0.0
      %90 = vst [vmem:[#allocation4 + $0x6] sm:$0x1] 0.0
      %91 = vst [vmem:[#allocation4 + $0x7] sm:$0x1] 0.0
      %92 = vst [vmem:[#allocation4 + $0x8] sm:$0x1] 0.0
      %93 = vst [vmem:[#allocation4 + $0x9] sm:$0x1] 0.0
      %94 = vst [vmem:[#allocation4 + $0xa] sm:$0x1] 0.0
      %95 = vst [vmem:[#allocation4 + $0xb] sm:$0x1] 0.0
      %96 = vst [vmem:[#allocation4 + $0xc] sm:$0x1] 0.0
      %97 = vst [vmem:[#allocation4 + $0xd] sm:$0x1] 0.0
      %98 = vst [vmem:[#allocation4 + $0xe] sm:$0x1] 0.0
      %99 = vst [vmem:[#allocation4 + $0xf] sm:$0x1] 0.0
    $region29: #{tpu_custom_call.1} parent=1 // pred_fallthru
      _
    %v100 = vld [vmem:[#allocation5] sm:$0xf]
    %v101 = vld [vmem:[#allocation5 + $0x4] sm:$0xf]
    %v102 = vld [vmem:[#allocation5 + $0x8] sm:$0xf]
    %v103 = vld [vmem:[#allocation5 + $0xc] sm:$0xf]
    %v104 = vld [vmem:[#allocation5 + $0x10] sm:$0xf]
    %v105 = vld [vmem:[#allocation5 + $0x14] sm:$0xf]
    %v106 = vld [vmem:[#allocation5 + $0x18] sm:$0xf]
    %v107 = vld [vmem:[#allocation5 + $0x1c] sm:$0xf]
    %v108 = vld [vmem:[#allocation5 + $0x20] sm:$0xf]
    %v109 = vld [vmem:[#allocation5 + $0x24] sm:$0xf]
    %v110 = vld [vmem:[#allocation5 + $0x28] sm:$0xf]
    %v111 = vld [vmem:[#allocation5 + $0x2c] sm:$0xf]
    %v112 = vld [vmem:[#allocation5 + $0x30] sm:$0xf]
    %v113 = vld [vmem:[#allocation5 + $0x34] sm:$0xf]
    %v114 = vld [vmem:[#allocation5 + $0x38] sm:$0xf]
    %v115 = vld [vmem:[#allocation5 + $0x3c] sm:$0xf]
    %v116 = vld [vmem:[#allocation5 + $0x40] sm:$0xf]
    %v117 = vld [vmem:[#allocation5 + $0x44] sm:$0xf]
    %v118 = vld [vmem:[#allocation5 + $0x48] sm:$0xf]
    %v119 = vld [vmem:[#allocation5 + $0x4c] sm:$0xf]
    %v120 = vld [vmem:[#allocation5 + $0x50] sm:$0xf]
    %v121 = vld [vmem:[#allocation5 + $0x54] sm:$0xf]
    %v122 = vld [vmem:[#allocation5 + $0x58] sm:$0xf]
    %v123 = vld [vmem:[#allocation5 + $0x5c] sm:$0xf]
    %v124 = vld [vmem:[#allocation5 + $0x60] sm:$0xf]
    %v125 = vld [vmem:[#allocation5 + $0x64] sm:$0xf]
    %v126 = vld [vmem:[#allocation5 + $0x68] sm:$0xf]
    %v127 = vld [vmem:[#allocation5 + $0x6c] sm:$0xf]
    %v128 = vld [vmem:[#allocation5 + $0x70] sm:$0xf]
    %v129 = vld [vmem:[#allocation5 + $0x74] sm:$0xf]
    %v130 = vld [vmem:[#allocation5 + $0x78] sm:$0xf]
    %v131 = vld [vmem:[#allocation5 + $0x7c] sm:$0xf]
    %v132 = vld [vmem:[#allocation5 + $0x80] sm:$0xf]
    %v133 = vld [vmem:[#allocation5 + $0x84] sm:$0xf]
    %v134 = vld [vmem:[#allocation5 + $0x88] sm:$0xf]
    %v135 = vld [vmem:[#allocation5 + $0x8c] sm:$0xf]
    %v136 = vld [vmem:[#allocation5 + $0x90] sm:$0xf]
    %v137 = vld [vmem:[#allocation5 + $0x94] sm:$0xf]
    %v138 = vld [vmem:[#allocation5 + $0x98] sm:$0xf]
    %v139 = vld [vmem:[#allocation5 + $0x9c] sm:$0xf]
    %v140 = vld [vmem:[#allocation5 + $0xa0] sm:$0xf]
    %v141 = vld [vmem:[#allocation5 + $0xa4] sm:$0xf]
    %v142 = vld [vmem:[#allocation5 + $0xa8] sm:$0xf]
    %v143 = vld [vmem:[#allocation5 + $0xac] sm:$0xf]
    %v144 = vld [vmem:[#allocation5 + $0xb0] sm:$0xf]
    %v145 = vld [vmem:[#allocation5 + $0xb4] sm:$0xf]
    %v146 = vld [vmem:[#allocation5 + $0xb8] sm:$0xf]
    %v147 = vld [vmem:[#allocation5 + $0xbc] sm:$0xf]
    %v148 = vld [vmem:[#allocation5 + $0xc0] sm:$0xf]
    %v149 = vld [vmem:[#allocation5 + $0xc4] sm:$0xf]
    %v150 = vld [vmem:[#allocation5 + $0xc8] sm:$0xf]
    %v151 = vld [vmem:[#allocation5 + $0xcc] sm:$0xf]
    %v152 = vld [vmem:[#allocation5 + $0xd0] sm:$0xf]
    %v153 = vld [vmem:[#allocation5 + $0xd4] sm:$0xf]
    %v154 = vld [vmem:[#allocation5 + $0xd8] sm:$0xf]
    %v155 = vld [vmem:[#allocation5 + $0xdc] sm:$0xf]
    %v156 = vld [vmem:[#allocation5 + $0xe0] sm:$0xf]
    %v157 = vld [vmem:[#allocation5 + $0xe4] sm:$0xf]
    %v158 = vld [vmem:[#allocation5 + $0xe8] sm:$0xf]
    %v159 = vld [vmem:[#allocation5 + $0xec] sm:$0xf]
    %v160 = vld [vmem:[#allocation5 + $0xf0] sm:$0xf]
    %v161 = vld [vmem:[#allocation5 + $0xf4] sm:$0xf]
    %v162 = vld [vmem:[#allocation5 + $0xf8] sm:$0xf]
    %v163 = vld [vmem:[#allocation5 + $0xfc] sm:$0xf]
    %v164 = vunpack.c.l.bf16 %v100
    %v165 = vunpack.c.l.bf16 %v101
    %v166 = vunpack.c.l.bf16 %v102
    %v167 = vunpack.c.l.bf16 %v103
    %v168 = vunpack.c.l.bf16 %v104
    %v169 = vunpack.c.l.bf16 %v105
    %v170 = vunpack.c.l.bf16 %v106
    %v171 = vunpack.c.l.bf16 %v107
    %v172 = vunpack.c.l.bf16 %v108
    %v173 = vunpack.c.l.bf16 %v109
    %v174 = vunpack.c.l.bf16 %v110
    %v175 = vunpack.c.l.bf16 %v111
    %v176 = vunpack.c.l.bf16 %v112
    %v177 = vunpack.c.l.bf16 %v113
    %v178 = vunpack.c.l.bf16 %v114
    %v179 = vunpack.c.l.bf16 %v115
    %v180 = vunpack.c.l.bf16 %v116
    %v181 = vunpack.c.l.bf16 %v117
    %v182 = vunpack.c.l.bf16 %v118
    %v183 = vunpack.c.l.bf16 %v119
    %v184 = vunpack.c.l.bf16 %v120
    %v185 = vunpack.c.l.bf16 %v121
    %v186 = vunpack.c.l.bf16 %v122
    %v187 = vunpack.c.l.bf16 %v123
    %v188 = vunpack.c.l.bf16 %v124
    %v189 = vunpack.c.l.bf16 %v125
    %v190 = vunpack.c.l.bf16 %v126
    %v191 = vunpack.c.l.bf16 %v127
    %v192 = vunpack.c.l.bf16 %v128
    %v193 = vunpack.c.l.bf16 %v129
    %v194 = vunpack.c.l.bf16 %v130
    %v195 = vunpack.c.l.bf16 %v131
    %v196 = vunpack.c.l.bf16 %v132
    %v197 = vunpack.c.l.bf16 %v133
    %v198 = vunpack.c.l.bf16 %v134
    %v199 = vunpack.c.l.bf16 %v135
    %v200 = vunpack.c.l.bf16 %v136
    %v201 = vunpack.c.l.bf16 %v137
    %v202 = vunpack.c.l.bf16 %v138
    %v203 = vunpack.c.l.bf16 %v139
    %v204 = vunpack.c.l.bf16 %v140
    %v205 = vunpack.c.l.bf16 %v141
    %v206 = vunpack.c.l.bf16 %v142
    %v207 = vunpack.c.l.bf16 %v143
    %v208 = vunpack.c.l.bf16 %v144
    %v209 = vunpack.c.l.bf16 %v145
    %v210 = vunpack.c.l.bf16 %v146
    %v211 = vunpack.c.l.bf16 %v147
    %v212 = vunpack.c.l.bf16 %v148
    %v213 = vunpack.c.l.bf16 %v149
    %v214 = vunpack.c.l.bf16 %v150
    %v215 = vunpack.c.l.bf16 %v151
    %v216 = vunpack.c.l.bf16 %v152
    %v217 = vunpack.c.l.bf16 %v153
    %v218 = vunpack.c.l.bf16 %v154
    %v219 = vunpack.c.l.bf16 %v155
    %v220 = vunpack.c.l.bf16 %v156
    %v221 = vunpack.c.l.bf16 %v157
    %v222 = vunpack.c.l.bf16 %v158
    %v223 = vunpack.c.l.bf16 %v159
    %v224 = vunpack.c.l.bf16 %v160
    %v225 = vunpack.c.l.bf16 %v161
    %v226 = vunpack.c.l.bf16 %v162
    %v227 = vunpack.c.l.bf16 %v163
    %v228 = vld [vmem:[%s1] sm:$0x1]
    %v230 = vlaneseq
    %v231 = vshrl.u32 %v230, 7
    %v232 = vsub.s32 0, %v231
    %v233 = vrot.slane %v228, %v232
    %v235 = vmul.f32 %v164, %v233
    %v236 = vmul.f32 %v165, %v233
    %v237 = vmul.f32 %v166, %v233
    %v238 = vmul.f32 %v167, %v233
    %v239 = vmul.f32 %v168, %v233
    %v240 = vmul.f32 %v169, %v233
    %v241 = vmul.f32 %v170, %v233
    %v242 = vmul.f32 %v171, %v233
    %v243 = vmul.f32 %v172, %v233
    %v244 = vmul.f32 %v173, %v233
    %v245 = vmul.f32 %v174, %v233
    %v246 = vmul.f32 %v175, %v233
    %v247 = vmul.f32 %v176, %v233
    %v248 = vmul.f32 %v177, %v233
    %v249 = vmul.f32 %v178, %v233
    %v250 = vmul.f32 %v179, %v233
    %v251 = vmul.f32 %v180, %v233
    %v252 = vmul.f32 %v181, %v233
    %v253 = vmul.f32 %v182, %v233
    %v254 = vmul.f32 %v183, %v233
    %v255 = vmul.f32 %v184, %v233
    %v256 = vmul.f32 %v185, %v233
    %v257 = vmul.f32 %v186, %v233
    %v258 = vmul.f32 %v187, %v233
    %v259 = vmul.f32 %v188, %v233
    %v260 = vmul.f32 %v189, %v233
    %v261 = vmul.f32 %v190, %v233
    %v262 = vmul.f32 %v191, %v233
    %v263 = vmul.f32 %v192, %v233
    %v264 = vmul.f32 %v193, %v233
    %v265 = vmul.f32 %v194, %v233
    %v266 = vmul.f32 %v195, %v233
    %v267 = vmul.f32 %v196, %v233
    %v268 = vmul.f32 %v197, %v233
    %v269 = vmul.f32 %v198, %v233
    %v270 = vmul.f32 %v199, %v233
    %v271 = vmul.f32 %v200, %v233
    %v272 = vmul.f32 %v201, %v233
    %v273 = vmul.f32 %v202, %v233
    %v274 = vmul.f32 %v203, %v233
    %v275 = vmul.f32 %v204, %v233
    %v276 = vmul.f32 %v205, %v233
    %v277 = vmul.f32 %v206, %v233
    %v278 = vmul.f32 %v207, %v233
    %v279 = vmul.f32 %v208, %v233
    %v280 = vmul.f32 %v209, %v233
    %v281 = vmul.f32 %v210, %v233
    %v282 = vmul.f32 %v211, %v233
    %v283 = vmul.f32 %v212, %v233
    %v284 = vmul.f32 %v213, %v233
    %v285 = vmul.f32 %v214, %v233
    %v286 = vmul.f32 %v215, %v233
    %v287 = vmul.f32 %v216, %v233
    %v288 = vmul.f32 %v217, %v233
    %v289 = vmul.f32 %v218, %v233
    %v290 = vmul.f32 %v219, %v233
    %v291 = vmul.f32 %v220, %v233
    %v292 = vmul.f32 %v221, %v233
    %v293 = vmul.f32 %v222, %v233
    %v294 = vmul.f32 %v223, %v233
    %v295 = vmul.f32 %v224, %v233
    %v296 = vmul.f32 %v225, %v233
    %v297 = vmul.f32 %v226, %v233
    %v298 = vmul.f32 %v227, %v233
    %299 = vadd.xlane.f32.xlu0 %v235
    %v300 = vpop.xlane.xlu0 %299
    %301 = vadd.xlane.f32.xlu0 %v236
    %v302 = vpop.xlane.xlu0 %301
    %303 = vadd.xlane.f32.xlu0 %v237
    %v304 = vpop.xlane.xlu0 %303
    %305 = vadd.xlane.f32.xlu0 %v238
    %v306 = vpop.xlane.xlu0 %305
    %307 = vadd.xlane.f32.xlu0 %v239
    %v308 = vpop.xlane.xlu0 %307
    %309 = vadd.xlane.f32.xlu0 %v240
    %v310 = vpop.xlane.xlu0 %309
    %311 = vadd.xlane.f32.xlu0 %v241
    %v312 = vpop.xlane.xlu0 %311
    %313 = vadd.xlane.f32.xlu0 %v242
    %v314 = vpop.xlane.xlu0 %313
    %315 = vadd.xlane.f32.xlu0 %v243
    %v316 = vpop.xlane.xlu0 %315
    %317 = vadd.xlane.f32.xlu0 %v244
    %v318 = vpop.xlane.xlu0 %317
    %319 = vadd.xlane.f32.xlu0 %v245
    %v320 = vpop.xlane.xlu0 %319
    %321 = vadd.xlane.f32.xlu0 %v246
    %v322 = vpop.xlane.xlu0 %321
    %323 = vadd.xlane.f32.xlu0 %v247
    %v324 = vpop.xlane.xlu0 %323
    %325 = vadd.xlane.f32.xlu0 %v248
    %v326 = vpop.xlane.xlu0 %325
    %327 = vadd.xlane.f32.xlu0 %v249
    %v328 = vpop.xlane.xlu0 %327
    %329 = vadd.xlane.f32.xlu0 %v250
    %v330 = vpop.xlane.xlu0 %329
    %331 = vadd.xlane.f32.xlu0 %v251
    %v332 = vpop.xlane.xlu0 %331
    %333 = vadd.xlane.f32.xlu0 %v252
    %v334 = vpop.xlane.xlu0 %333
    %335 = vadd.xlane.f32.xlu0 %v253
    %v336 = vpop.xlane.xlu0 %335
    %337 = vadd.xlane.f32.xlu0 %v254
    %v338 = vpop.xlane.xlu0 %337
    %339 = vadd.xlane.f32.xlu0 %v255
    %v340 = vpop.xlane.xlu0 %339
    %341 = vadd.xlane.f32.xlu0 %v256
    %v342 = vpop.xlane.xlu0 %341
    %343 = vadd.xlane.f32.xlu0 %v257
    %v344 = vpop.xlane.xlu0 %343
    %345 = vadd.xlane.f32.xlu0 %v258
    %v346 = vpop.xlane.xlu0 %345
    %347 = vadd.xlane.f32.xlu0 %v259
    %v348 = vpop.xlane.xlu0 %347
    %349 = vadd.xlane.f32.xlu0 %v260
    %v350 = vpop.xlane.xlu0 %349
    %351 = vadd.xlane.f32.xlu0 %v261
    %v352 = vpop.xlane.xlu0 %351
    %353 = vadd.xlane.f32.xlu0 %v262
    %v354 = vpop.xlane.xlu0 %353
    %355 = vadd.xlane.f32.xlu0 %v263
    %v356 = vpop.xlane.xlu0 %355
    %357 = vadd.xlane.f32.xlu0 %v264
    %v358 = vpop.xlane.xlu0 %357
    %359 = vadd.xlane.f32.xlu0 %v265
    %v360 = vpop.xlane.xlu0 %359
    %361 = vadd.xlane.f32.xlu0 %v266
    %v362 = vpop.xlane.xlu0 %361
    %363 = vadd.xlane.f32.xlu0 %v267
    %v364 = vpop.xlane.xlu0 %363
    %365 = vadd.xlane.f32.xlu0 %v268
    %v366 = vpop.xlane.xlu0 %365
    %367 = vadd.xlane.f32.xlu0 %v269
    %v368 = vpop.xlane.xlu0 %367
    %369 = vadd.xlane.f32.xlu0 %v270
    %v370 = vpop.xlane.xlu0 %369
    %371 = vadd.xlane.f32.xlu0 %v271
    %v372 = vpop.xlane.xlu0 %371
    %373 = vadd.xlane.f32.xlu0 %v272
    %v374 = vpop.xlane.xlu0 %373
    %375 = vadd.xlane.f32.xlu0 %v273
    %v376 = vpop.xlane.xlu0 %375
    %377 = vadd.xlane.f32.xlu0 %v274
    %v378 = vpop.xlane.xlu0 %377
    %379 = vadd.xlane.f32.xlu0 %v275
    %v380 = vpop.xlane.xlu0 %379
    %381 = vadd.xlane.f32.xlu0 %v276
    %v382 = vpop.xlane.xlu0 %381
    %383 = vadd.xlane.f32.xlu0 %v277
    %v384 = vpop.xlane.xlu0 %383
    %385 = vadd.xlane.f32.xlu0 %v278
    %v386 = vpop.xlane.xlu0 %385
    %387 = vadd.xlane.f32.xlu0 %v279
    %v388 = vpop.xlane.xlu0 %387
    %389 = vadd.xlane.f32.xlu0 %v280
    %v390 = vpop.xlane.xlu0 %389
    %391 = vadd.xlane.f32.xlu0 %v281
    %v392 = vpop.xlane.xlu0 %391
    %393 = vadd.xlane.f32.xlu0 %v282
    %v394 = vpop.xlane.xlu0 %393
    %395 = vadd.xlane.f32.xlu0 %v283
    %v396 = vpop.xlane.xlu0 %395
    %397 = vadd.xlane.f32.xlu0 %v284
    %v398 = vpop.xlane.xlu0 %397
    %399 = vadd.xlane.f32.xlu0 %v285
    %v400 = vpop.xlane.xlu0 %399
    %401 = vadd.xlane.f32.xlu0 %v286
    %v402 = vpop.xlane.xlu0 %401
    %403 = vadd.xlane.f32.xlu0 %v287
    %v404 = vpop.xlane.xlu0 %403
    %405 = vadd.xlane.f32.xlu0 %v288
    %v406 = vpop.xlane.xlu0 %405
    %407 = vadd.xlane.f32.xlu0 %v289
    %v408 = vpop.xlane.xlu0 %407
    %409 = vadd.xlane.f32.xlu0 %v290
    %v410 = vpop.xlane.xlu0 %409
    %411 = vadd.xlane.f32.xlu0 %v291
    %v412 = vpop.xlane.xlu0 %411
    %413 = vadd.xlane.f32.xlu0 %v292
    %v414 = vpop.xlane.xlu0 %413
    %415 = vadd.xlane.f32.xlu0 %v293
    %v416 = vpop.xlane.xlu0 %415
    %417 = vadd.xlane.f32.xlu0 %v294
    %v418 = vpop.xlane.xlu0 %417
    %419 = vadd.xlane.f32.xlu0 %v295
    %v420 = vpop.xlane.xlu0 %419
    %421 = vadd.xlane.f32.xlu0 %v296
    %v422 = vpop.xlane.xlu0 %421
    %423 = vadd.xlane.f32.xlu0 %v297
    %v424 = vpop.xlane.xlu0 %423
    %425 = vadd.xlane.f32.xlu0 %v298
    %v426 = vpop.xlane.xlu0 %425
    %v427 = vld [vmem:[#allocation2] sm:$0x1]
    %v428 = vld [vmem:[#allocation2 + $0x1] sm:$0x1]
    %v429 = vld [vmem:[#allocation2 + $0x2] sm:$0x1]
    %v430 = vld [vmem:[#allocation2 + $0x3] sm:$0x1]
    %v431 = vld [vmem:[#allocation2 + $0x4] sm:$0x1]
    %v432 = vld [vmem:[#allocation2 + $0x5] sm:$0x1]
    %v433 = vld [vmem:[#allocation2 + $0x6] sm:$0x1]
    %v434 = vld [vmem:[#allocation2 + $0x7] sm:$0x1]
    %v435 = vld [vmem:[#allocation2 + $0x8] sm:$0x1]
    %v436 = vld [vmem:[#allocation2 + $0x9] sm:$0x1]
    %v437 = vld [vmem:[#allocation2 + $0xa] sm:$0x1]
    %v438 = vld [vmem:[#allocation2 + $0xb] sm:$0x1]
    %v439 = vld [vmem:[#allocation2 + $0xc] sm:$0x1]
    %v440 = vld [vmem:[#allocation2 + $0xd] sm:$0x1]
    %v441 = vld [vmem:[#allocation2 + $0xe] sm:$0x1]
    %v442 = vld [vmem:[#allocation2 + $0xf] sm:$0x1]
    %v443 = vmax.f32 %v300, %v302
    %v444 = vmax.f32 %v443, %v304
    %v445 = vmax.f32 %v444, %v306
    %v446 = vrot.slane %v445, 4
    %v447 = vmax.f32 %v445, %v446
    %v448 = vrot.slane %v447, 2
    %v449 = vmax.f32 %v447, %v448
    %v450 = vrot.slane %v449, 1
    %v451 = vmax.f32 %v449, %v450
    %v452 = vmax.f32 %v308, %v310
    %v453 = vmax.f32 %v452, %v312
    %v454 = vmax.f32 %v453, %v314
    %v455 = vrot.slane %v454, 4
    %v456 = vmax.f32 %v454, %v455
    %v457 = vrot.slane %v456, 2
    %v458 = vmax.f32 %v456, %v457
    %v459 = vrot.slane %v458, 1
    %v460 = vmax.f32 %v458, %v459
    %v461 = vmax.f32 %v316, %v318
    %v462 = vmax.f32 %v461, %v320
    %v463 = vmax.f32 %v462, %v322
    %v464 = vrot.slane %v463, 4
    %v465 = vmax.f32 %v463, %v464
    %v466 = vrot.slane %v465, 2
    %v467 = vmax.f32 %v465, %v466
    %v468 = vrot.slane %v467, 1
    %v469 = vmax.f32 %v467, %v468
    %v470 = vmax.f32 %v324, %v326
    %v471 = vmax.f32 %v470, %v328
    %v472 = vmax.f32 %v471, %v330
    %v473 = vrot.slane %v472, 4
    %v474 = vmax.f32 %v472, %v473
    %v475 = vrot.slane %v474, 2
    %v476 = vmax.f32 %v474, %v475
    %v477 = vrot.slane %v476, 1
    %v478 = vmax.f32 %v476, %v477
    %v479 = vmax.f32 %v332, %v334
    %v480 = vmax.f32 %v479, %v336
    %v481 = vmax.f32 %v480, %v338
    %v482 = vrot.slane %v481, 4
    %v483 = vmax.f32 %v481, %v482
    %v484 = vrot.slane %v483, 2
    %v485 = vmax.f32 %v483, %v484
    %v486 = vrot.slane %v485, 1
    %v487 = vmax.f32 %v485, %v486
    %v488 = vmax.f32 %v340, %v342
    %v489 = vmax.f32 %v488, %v344
    %v490 = vmax.f32 %v489, %v346
    %v491 = vrot.slane %v490, 4
    %v492 = vmax.f32 %v490, %v491
    %v493 = vrot.slane %v492, 2
    %v494 = vmax.f32 %v492, %v493
    %v495 = vrot.slane %v494, 1
    %v496 = vmax.f32 %v494, %v495
    %v497 = vmax.f32 %v348, %v350
    %v498 = vmax.f32 %v497, %v352
    %v499 = vmax.f32 %v498, %v354
    %v500 = vrot.slane %v499, 4
    %v501 = vmax.f32 %v499, %v500
    %v502 = vrot.slane %v501, 2
    %v503 = vmax.f32 %v501, %v502
    %v504 = vrot.slane %v503, 1
    %v505 = vmax.f32 %v503, %v504
    %v506 = vmax.f32 %v356, %v358
    %v507 = vmax.f32 %v506, %v360
    %v508 = vmax.f32 %v507, %v362
    %v509 = vrot.slane %v508, 4
    %v510 = vmax.f32 %v508, %v509
    %v511 = vrot.slane %v510, 2
    %v512 = vmax.f32 %v510, %v511
    %v513 = vrot.slane %v512, 1
    %v514 = vmax.f32 %v512, %v513
    %v515 = vmax.f32 %v364, %v366
    %v516 = vmax.f32 %v515, %v368
    %v517 = vmax.f32 %v516, %v370
    %v518 = vrot.slane %v517, 4
    %v519 = vmax.f32 %v517, %v518
    %v520 = vrot.slane %v519, 2
    %v521 = vmax.f32 %v519, %v520
    %v522 = vrot.slane %v521, 1
    %v523 = vmax.f32 %v521, %v522
    %v524 = vmax.f32 %v372, %v374
    %v525 = vmax.f32 %v524, %v376
    %v526 = vmax.f32 %v525, %v378
    %v527 = vrot.slane %v526, 4
    %v528 = vmax.f32 %v526, %v527
    %v529 = vrot.slane %v528, 2
    %v530 = vmax.f32 %v528, %v529
    %v531 = vrot.slane %v530, 1
    %v532 = vmax.f32 %v530, %v531
    %v533 = vmax.f32 %v380, %v382
    %v534 = vmax.f32 %v533, %v384
    %v535 = vmax.f32 %v534, %v386
    %v536 = vrot.slane %v535, 4
    %v537 = vmax.f32 %v535, %v536
    %v538 = vrot.slane %v537, 2
    %v539 = vmax.f32 %v537, %v538
    %v540 = vrot.slane %v539, 1
    %v541 = vmax.f32 %v539, %v540
    %v542 = vmax.f32 %v388, %v390
    %v543 = vmax.f32 %v542, %v392
    %v544 = vmax.f32 %v543, %v394
    %v545 = vrot.slane %v544, 4
    %v546 = vmax.f32 %v544, %v545
    %v547 = vrot.slane %v546, 2
    %v548 = vmax.f32 %v546, %v547
    %v549 = vrot.slane %v548, 1
    %v550 = vmax.f32 %v548, %v549
    %v551 = vmax.f32 %v396, %v398
    %v552 = vmax.f32 %v551, %v400
    %v553 = vmax.f32 %v552, %v402
    %v554 = vrot.slane %v553, 4
    %v555 = vmax.f32 %v553, %v554
    %v556 = vrot.slane %v555, 2
    %v557 = vmax.f32 %v555, %v556
    %v558 = vrot.slane %v557, 1
    %v559 = vmax.f32 %v557, %v558
    %v560 = vmax.f32 %v404, %v406
    %v561 = vmax.f32 %v560, %v408
    %v562 = vmax.f32 %v561, %v410
    %v563 = vrot.slane %v562, 4
    %v564 = vmax.f32 %v562, %v563
    %v565 = vrot.slane %v564, 2
    %v566 = vmax.f32 %v564, %v565
    %v567 = vrot.slane %v566, 1
    %v568 = vmax.f32 %v566, %v567
    %v569 = vmax.f32 %v412, %v414
    %v570 = vmax.f32 %v569, %v416
    %v571 = vmax.f32 %v570, %v418
    %v572 = vrot.slane %v571, 4
    %v573 = vmax.f32 %v571, %v572
    %v574 = vrot.slane %v573, 2
    %v575 = vmax.f32 %v573, %v574
    %v576 = vrot.slane %v575, 1
    %v577 = vmax.f32 %v575, %v576
    %v578 = vmax.f32 %v420, %v422
    %v579 = vmax.f32 %v578, %v424
    %v580 = vmax.f32 %v579, %v426
    %v581 = vrot.slane %v580, 4
    %v582 = vmax.f32 %v580, %v581
    %v583 = vrot.slane %v582, 2
    %v584 = vmax.f32 %v582, %v583
    %v585 = vrot.slane %v584, 1
    %v586 = vmax.f32 %v584, %v585
    %v587 = vmax.f32 %v427, %v451
    %v588 = vmax.f32 %v428, %v460
    %v589 = vmax.f32 %v429, %v469
    %v590 = vmax.f32 %v430, %v478
    %v591 = vmax.f32 %v431, %v487
    %v592 = vmax.f32 %v432, %v496
    %v593 = vmax.f32 %v433, %v505
    %v594 = vmax.f32 %v434, %v514
    %v595 = vmax.f32 %v435, %v523
    %v596 = vmax.f32 %v436, %v532
    %v597 = vmax.f32 %v437, %v541
    %v598 = vmax.f32 %v438, %v550
    %v599 = vmax.f32 %v439, %v559
    %v600 = vmax.f32 %v440, %v568
    %v601 = vmax.f32 %v441, %v577
    %v602 = vmax.f32 %v442, %v586
    %v603 = vsub.f32 %v427, %v587
    %v604 = vsub.f32 %v428, %v588
    %v605 = vsub.f32 %v429, %v589
    %v606 = vsub.f32 %v430, %v590
    %v607 = vsub.f32 %v431, %v591
    %v608 = vsub.f32 %v432, %v592
    %v609 = vsub.f32 %v433, %v593
    %v610 = vsub.f32 %v434, %v594
    %v611 = vsub.f32 %v435, %v595
    %v612 = vsub.f32 %v436, %v596
    %v613 = vsub.f32 %v437, %v597
    %v614 = vsub.f32 %v438, %v598
    %v615 = vsub.f32 %v439, %v599
    %v616 = vsub.f32 %v440, %v600
    %v617 = vsub.f32 %v441, %v601
    %v618 = vsub.f32 %v442, %v602
    %v619 = vmul.f32 %v603, 1.442695
    %v620 = vpow.pop %v619
    %v621 = vmul.f32 %v604, 1.442695
    %v622 = vpow.pop %v621
    %v623 = vmul.f32 %v605, 1.442695
    %v624 = vpow.pop %v623
    %v625 = vmul.f32 %v606, 1.442695
    %v626 = vpow.pop %v625
    %v627 = vmul.f32 %v607, 1.442695
    %v628 = vpow.pop %v627
    %v629 = vmul.f32 %v608, 1.442695
    %v630 = vpow.pop %v629
    %v631 = vmul.f32 %v609, 1.442695
    %v632 = vpow.pop %v631
    %v633 = vmul.f32 %v610, 1.442695
    %v634 = vpow.pop %v633
    %v635 = vmul.f32 %v611, 1.442695
    %v636 = vpow.pop %v635
    %v637 = vmul.f32 %v612, 1.442695
    %v638 = vpow.pop %v637
    %v639 = vmul.f32 %v613, 1.442695
    %v640 = vpow.pop %v639
    %v641 = vmul.f32 %v614, 1.442695
    %v642 = vpow.pop %v641
    %v643 = vmul.f32 %v615, 1.442695
    %v644 = vpow.pop %v643
    %v645 = vmul.f32 %v616, 1.442695
    %v646 = vpow.pop %v645
    %v647 = vmul.f32 %v617, 1.442695
    %v648 = vpow.pop %v647
    %v649 = vmul.f32 %v618, 1.442695
    %v650 = vpow.pop %v649
    %v667 = vlaneseq
    %v668 = vshrl.u32 %v667, 7
    %v669 = vsub.s32 0, %v668
    %v670 = vrot.slane %v587, %v669
    %v671 = vlaneseq
    %v672 = vshrl.u32 %v671, 7
    %v673 = vsub.s32 0, %v672
    %v674 = vrot.slane %v588, %v673
    %v675 = vlaneseq
    %v676 = vshrl.u32 %v675, 7
    %v677 = vsub.s32 0, %v676
    %v678 = vrot.slane %v589, %v677
    %v679 = vlaneseq
    %v680 = vshrl.u32 %v679, 7
    %v681 = vsub.s32 0, %v680
    %v682 = vrot.slane %v590, %v681
    %v683 = vlaneseq
    %v684 = vshrl.u32 %v683, 7
    %v685 = vsub.s32 0, %v684
    %v686 = vrot.slane %v591, %v685
    %v687 = vlaneseq
    %v688 = vshrl.u32 %v687, 7
    %v689 = vsub.s32 0, %v688
    %v690 = vrot.slane %v592, %v689
    %v691 = vlaneseq
    %v692 = vshrl.u32 %v691, 7
    %v693 = vsub.s32 0, %v692
    %v694 = vrot.slane %v593, %v693
    %v695 = vlaneseq
    %v696 = vshrl.u32 %v695, 7
    %v697 = vsub.s32 0, %v696
    %v698 = vrot.slane %v594, %v697
    %v699 = vlaneseq
    %v700 = vshrl.u32 %v699, 7
    %v701 = vsub.s32 0, %v700
    %v702 = vrot.slane %v595, %v701
    %v703 = vlaneseq
    %v704 = vshrl.u32 %v703, 7
    %v705 = vsub.s32 0, %v704
    %v706 = vrot.slane %v596, %v705
    %v707 = vlaneseq
    %v708 = vshrl.u32 %v707, 7
    %v709 = vsub.s32 0, %v708
    %v710 = vrot.slane %v597, %v709
    %v711 = vlaneseq
    %v712 = vshrl.u32 %v711, 7
    %v713 = vsub.s32 0, %v712
    %v714 = vrot.slane %v598, %v713
    %v715 = vlaneseq
    %v716 = vshrl.u32 %v715, 7
    %v717 = vsub.s32 0, %v716
    %v718 = vrot.slane %v599, %v717
    %v719 = vlaneseq
    %v720 = vshrl.u32 %v719, 7
    %v721 = vsub.s32 0, %v720
    %v722 = vrot.slane %v600, %v721
    %v723 = vlaneseq
    %v724 = vshrl.u32 %v723, 7
    %v725 = vsub.s32 0, %v724
    %v726 = vrot.slane %v601, %v725
    %v727 = vlaneseq
    %v728 = vshrl.u32 %v727, 7
    %v729 = vsub.s32 0, %v728
    %v730 = vrot.slane %v602, %v729
    %v747 = vsub.f32 %v300, %v670
    %v748 = vsub.f32 %v302, %v670
    %v749 = vsub.f32 %v304, %v670
    %v750 = vsub.f32 %v306, %v670
    %v751 = vsub.f32 %v308, %v674
    %v752 = vsub.f32 %v310, %v674
    %v753 = vsub.f32 %v312, %v674
    %v754 = vsub.f32 %v314, %v674
    %v755 = vsub.f32 %v316, %v678
    %v756 = vsub.f32 %v318, %v678
    %v757 = vsub.f32 %v320, %v678
    %v758 = vsub.f32 %v322, %v678
    %v759 = vsub.f32 %v324, %v682
    %v760 = vsub.f32 %v326, %v682
    %v761 = vsub.f32 %v328, %v682
    %v762 = vsub.f32 %v330, %v682
    %v763 = vsub.f32 %v332, %v686
    %v764 = vsub.f32 %v334, %v686
    %v765 = vsub.f32 %v336, %v686
    %v766 = vsub.f32 %v338, %v686
    %v767 = vsub.f32 %v340, %v690
    %v768 = vsub.f32 %v342, %v690
    %v769 = vsub.f32 %v344, %v690
    %v770 = vsub.f32 %v346, %v690
    %v771 = vsub.f32 %v348, %v694
    %v772 = vsub.f32 %v350, %v694
    %v773 = vsub.f32 %v352, %v694
    %v774 = vsub.f32 %v354, %v694
    %v775 = vsub.f32 %v356, %v698
    %v776 = vsub.f32 %v358, %v698
    %v777 = vsub.f32 %v360, %v698
    %v778 = vsub.f32 %v362, %v698
    %v779 = vsub.f32 %v364, %v702
    %v780 = vsub.f32 %v366, %v702
    %v781 = vsub.f32 %v368, %v702
    %v782 = vsub.f32 %v370, %v702
    %v783 = vsub.f32 %v372, %v706
    %v784 = vsub.f32 %v374, %v706
    %v785 = vsub.f32 %v376, %v706
    %v786 = vsub.f32 %v378, %v706
    %v787 = vsub.f32 %v380, %v710
    %v788 = vsub.f32 %v382, %v710
    %v789 = vsub.f32 %v384, %v710
    %v790 = vsub.f32 %v386, %v710
    %v791 = vsub.f32 %v388, %v714
    %v792 = vsub.f32 %v390, %v714
    %v793 = vsub.f32 %v392, %v714
    %v794 = vsub.f32 %v394, %v714
    %v795 = vsub.f32 %v396, %v718
    %v796 = vsub.f32 %v398, %v718
    %v797 = vsub.f32 %v400, %v718
    %v798 = vsub.f32 %v402, %v718
    %v799 = vsub.f32 %v404, %v722
    %v800 = vsub.f32 %v406, %v722
    %v801 = vsub.f32 %v408, %v722
    %v802 = vsub.f32 %v410, %v722
    %v803 = vsub.f32 %v412, %v726
    %v804 = vsub.f32 %v414, %v726
    %v805 = vsub.f32 %v416, %v726
    %v806 = vsub.f32 %v418, %v726
    %v807 = vsub.f32 %v420, %v730
    %v808 = vsub.f32 %v422, %v730
    %v809 = vsub.f32 %v424, %v730
    %v810 = vsub.f32 %v426, %v730
    %v811 = vmul.f32 %v747, 1.442695
    %v812 = vpow.pop %v811
    %v813 = vmul.f32 %v748, 1.442695
    %v814 = vpow.pop %v813
    %v815 = vmul.f32 %v749, 1.442695
    %v816 = vpow.pop %v815
    %v817 = vmul.f32 %v750, 1.442695
    %v818 = vpow.pop %v817
    %v819 = vmul.f32 %v751, 1.442695
    %v820 = vpow.pop %v819
    %v821 = vmul.f32 %v752, 1.442695
    %v822 = vpow.pop %v821
    %v823 = vmul.f32 %v753, 1.442695
    %v824 = vpow.pop %v823
    %v825 = vmul.f32 %v754, 1.442695
    %v826 = vpow.pop %v825
    %v827 = vmul.f32 %v755, 1.442695
    %v828 = vpow.pop %v827
    %v829 = vmul.f32 %v756, 1.442695
    %v830 = vpow.pop %v829
    %v831 = vmul.f32 %v757, 1.442695
    %v832 = vpow.pop %v831
    %v833 = vmul.f32 %v758, 1.442695
    %v834 = vpow.pop %v833
    %v835 = vmul.f32 %v759, 1.442695
    %v836 = vpow.pop %v835
    %v837 = vmul.f32 %v760, 1.442695
    %v838 = vpow.pop %v837
    %v839 = vmul.f32 %v761, 1.442695
    %v840 = vpow.pop %v839
    %v841 = vmul.f32 %v762, 1.442695
    %v842 = vpow.pop %v841
    %v843 = vmul.f32 %v763, 1.442695
    %v844 = vpow.pop %v843
    %v845 = vmul.f32 %v764, 1.442695
    %v846 = vpow.pop %v845
    %v847 = vmul.f32 %v765, 1.442695
    %v848 = vpow.pop %v847
    %v849 = vmul.f32 %v766, 1.442695
    %v850 = vpow.pop %v849
    %v851 = vmul.f32 %v767, 1.442695
    %v852 = vpow.pop %v851
    %v853 = vmul.f32 %v768, 1.442695
    %v854 = vpow.pop %v853
    %v855 = vmul.f32 %v769, 1.442695
    %v856 = vpow.pop %v855
    %v857 = vmul.f32 %v770, 1.442695
    %v858 = vpow.pop %v857
    %v859 = vmul.f32 %v771, 1.442695
    %v860 = vpow.pop %v859
    %v861 = vmul.f32 %v772, 1.442695
    %v862 = vpow.pop %v861
    %v863 = vmul.f32 %v773, 1.442695
    %v864 = vpow.pop %v863
    %v865 = vmul.f32 %v774, 1.442695
    %v866 = vpow.pop %v865
    %v867 = vmul.f32 %v775, 1.442695
    %v868 = vpow.pop %v867
    %v869 = vmul.f32 %v776, 1.442695
    %v870 = vpow.pop %v869
    %v871 = vmul.f32 %v777, 1.442695
    %v872 = vpow.pop %v871
    %v873 = vmul.f32 %v778, 1.442695
    %v874 = vpow.pop %v873
    %v875 = vmul.f32 %v779, 1.442695
    %v876 = vpow.pop %v875
    %v877 = vmul.f32 %v780, 1.442695
    %v878 = vpow.pop %v877
    %v879 = vmul.f32 %v781, 1.442695
    %v880 = vpow.pop %v879
    %v881 = vmul.f32 %v782, 1.442695
    %v882 = vpow.pop %v881
    %v883 = vmul.f32 %v783, 1.442695
    %v884 = vpow.pop %v883
    %v885 = vmul.f32 %v784, 1.442695
    %v886 = vpow.pop %v885
    %v887 = vmul.f32 %v785, 1.442695
    %v888 = vpow.pop %v887
    %v889 = vmul.f32 %v786, 1.442695
    %v890 = vpow.pop %v889
    %v891 = vmul.f32 %v787, 1.442695
    %v892 = vpow.pop %v891
    %v893 = vmul.f32 %v788, 1.442695
    %v894 = vpow.pop %v893
    %v895 = vmul.f32 %v789, 1.442695
    %v896 = vpow.pop %v895
    %v897 = vmul.f32 %v790, 1.442695
    %v898 = vpow.pop %v897
    %v899 = vmul.f32 %v791, 1.442695
    %v900 = vpow.pop %v899
    %v901 = vmul.f32 %v792, 1.442695
    %v902 = vpow.pop %v901
    %v903 = vmul.f32 %v793, 1.442695
    %v904 = vpow.pop %v903
    %v905 = vmul.f32 %v794, 1.442695
    %v906 = vpow.pop %v905
    %v907 = vmul.f32 %v795, 1.442695
    %v908 = vpow.pop %v907
    %v909 = vmul.f32 %v796, 1.442695
    %v910 = vpow.pop %v909
    %v911 = vmul.f32 %v797, 1.442695
    %v912 = vpow.pop %v911
    %v913 = vmul.f32 %v798, 1.442695
    %v914 = vpow.pop %v913
    %v915 = vmul.f32 %v799, 1.442695
    %v916 = vpow.pop %v915
    %v917 = vmul.f32 %v800, 1.442695
    %v918 = vpow.pop %v917
    %v919 = vmul.f32 %v801, 1.442695
    %v920 = vpow.pop %v919
    %v921 = vmul.f32 %v802, 1.442695
    %v922 = vpow.pop %v921
    %v923 = vmul.f32 %v803, 1.442695
    %v924 = vpow.pop %v923
    %v925 = vmul.f32 %v804, 1.442695
    %v926 = vpow.pop %v925
    %v927 = vmul.f32 %v805, 1.442695
    %v928 = vpow.pop %v927
    %v929 = vmul.f32 %v806, 1.442695
    %v930 = vpow.pop %v929
    %v931 = vmul.f32 %v807, 1.442695
    %v932 = vpow.pop %v931
    %v933 = vmul.f32 %v808, 1.442695
    %v934 = vpow.pop %v933
    %v935 = vmul.f32 %v809, 1.442695
    %v936 = vpow.pop %v935
    %v937 = vmul.f32 %v810, 1.442695
    %v938 = vpow.pop %v937
    %v939 = vld [vmem:[#allocation3] sm:$0x1]
    %v940 = vld [vmem:[#allocation3 + $0x1] sm:$0x1]
    %v941 = vld [vmem:[#allocation3 + $0x2] sm:$0x1]
    %v942 = vld [vmem:[#allocation3 + $0x3] sm:$0x1]
    %v943 = vld [vmem:[#allocation3 + $0x4] sm:$0x1]
    %v944 = vld [vmem:[#allocation3 + $0x5] sm:$0x1]
    %v945 = vld [vmem:[#allocation3 + $0x6] sm:$0x1]
    %v946 = vld [vmem:[#allocation3 + $0x7] sm:$0x1]
    %v947 = vld [vmem:[#allocation3 + $0x8] sm:$0x1]
    %v948 = vld [vmem:[#allocation3 + $0x9] sm:$0x1]
    %v949 = vld [vmem:[#allocation3 + $0xa] sm:$0x1]
    %v950 = vld [vmem:[#allocation3 + $0xb] sm:$0x1]
    %v951 = vld [vmem:[#allocation3 + $0xc] sm:$0x1]
    %v952 = vld [vmem:[#allocation3 + $0xd] sm:$0x1]
    %v953 = vld [vmem:[#allocation3 + $0xe] sm:$0x1]
    %v954 = vld [vmem:[#allocation3 + $0xf] sm:$0x1]
    %v955 = vmul.f32 %v620, %v939
    %v956 = vmul.f32 %v622, %v940
    %v957 = vmul.f32 %v624, %v941
    %v958 = vmul.f32 %v626, %v942
    %v959 = vmul.f32 %v628, %v943
    %v960 = vmul.f32 %v630, %v944
    %v961 = vmul.f32 %v632, %v945
    %v962 = vmul.f32 %v634, %v946
    %v963 = vmul.f32 %v636, %v947
    %v964 = vmul.f32 %v638, %v948
    %v965 = vmul.f32 %v640, %v949
    %v966 = vmul.f32 %v642, %v950
    %v967 = vmul.f32 %v644, %v951
    %v968 = vmul.f32 %v646, %v952
    %v969 = vmul.f32 %v648, %v953
    %v970 = vmul.f32 %v650, %v954
    %vm971 = vcmask 7168
    %v972 = vsel %vm971, %v812, 0.0
    %v973 = vsel %vm971, %v814, 0.0
    %v974 = vadd.f32 %v972, %v973
    %v975 = vsel %vm971, %v816, 0.0
    %v976 = vadd.f32 %v974, %v975
    %v977 = vsel %vm971, %v818, 0.0
    %v978 = vadd.f32 %v976, %v977
    %v979 = vrot.slane %v978, 4
    %v980 = vadd.f32 %v978, %v979
    %v981 = vrot.slane %v980, 2
    %v982 = vadd.f32 %v980, %v981
    %v983 = vrot.slane %v982, 1
    %v984 = vadd.f32 %v982, %v983
    %v985 = vsel %vm971, %v820, 0.0
    %v986 = vsel %vm971, %v822, 0.0
    %v987 = vadd.f32 %v985, %v986
    %v988 = vsel %vm971, %v824, 0.0
    %v989 = vadd.f32 %v987, %v988
    %v990 = vsel %vm971, %v826, 0.0
    %v991 = vadd.f32 %v989, %v990
    %v992 = vrot.slane %v991, 4
    %v993 = vadd.f32 %v991, %v992
    %v994 = vrot.slane %v993, 2
    %v995 = vadd.f32 %v993, %v994
    %v996 = vrot.slane %v995, 1
    %v997 = vadd.f32 %v995, %v996
    %v998 = vsel %vm971, %v828, 0.0
    %v999 = vsel %vm971, %v830, 0.0
    %v1000 = vadd.f32 %v998, %v999
    %v1001 = vsel %vm971, %v832, 0.0
    %v1002 = vadd.f32 %v1000, %v1001
    %v1003 = vsel %vm971, %v834, 0.0
    %v1004 = vadd.f32 %v1002, %v1003
    %v1005 = vrot.slane %v1004, 4
    %v1006 = vadd.f32 %v1004, %v1005
    %v1007 = vrot.slane %v1006, 2
    %v1008 = vadd.f32 %v1006, %v1007
    %v1009 = vrot.slane %v1008, 1
    %v1010 = vadd.f32 %v1008, %v1009
    %v1011 = vsel %vm971, %v836, 0.0
    %v1012 = vsel %vm971, %v838, 0.0
    %v1013 = vadd.f32 %v1011, %v1012
    %v1014 = vsel %vm971, %v840, 0.0
    %v1015 = vadd.f32 %v1013, %v1014
    %v1016 = vsel %vm971, %v842, 0.0
    %v1017 = vadd.f32 %v1015, %v1016
    %v1018 = vrot.slane %v1017, 4
    %v1019 = vadd.f32 %v1017, %v1018
    %v1020 = vrot.slane %v1019, 2
    %v1021 = vadd.f32 %v1019, %v1020
    %v1022 = vrot.slane %v1021, 1
    %v1023 = vadd.f32 %v1021, %v1022
    %v1024 = vsel %vm971, %v844, 0.0
    %v1025 = vsel %vm971, %v846, 0.0
    %v1026 = vadd.f32 %v1024, %v1025
    %v1027 = vsel %vm971, %v848, 0.0
    %v1028 = vadd.f32 %v1026, %v1027
    %v1029 = vsel %vm971, %v850, 0.0
    %v1030 = vadd.f32 %v1028, %v1029
    %v1031 = vrot.slane %v1030, 4
    %v1032 = vadd.f32 %v1030, %v1031
    %v1033 = vrot.slane %v1032, 2
    %v1034 = vadd.f32 %v1032, %v1033
    %v1035 = vrot.slane %v1034, 1
    %v1036 = vadd.f32 %v1034, %v1035
    %v1037 = vsel %vm971, %v852, 0.0
    %v1038 = vsel %vm971, %v854, 0.0
    %v1039 = vadd.f32 %v1037, %v1038
    %v1040 = vsel %vm971, %v856, 0.0
    %v1041 = vadd.f32 %v1039, %v1040
    %v1042 = vsel %vm971, %v858, 0.0
    %v1043 = vadd.f32 %v1041, %v1042
    %v1044 = vrot.slane %v1043, 4
    %v1045 = vadd.f32 %v1043, %v1044
    %v1046 = vrot.slane %v1045, 2
    %v1047 = vadd.f32 %v1045, %v1046
    %v1048 = vrot.slane %v1047, 1
    %v1049 = vadd.f32 %v1047, %v1048
    %v1050 = vsel %vm971, %v860, 0.0
    %v1051 = vsel %vm971, %v862, 0.0
    %v1052 = vadd.f32 %v1050, %v1051
    %v1053 = vsel %vm971, %v864, 0.0
    %v1054 = vadd.f32 %v1052, %v1053
    %v1055 = vsel %vm971, %v866, 0.0
    %v1056 = vadd.f32 %v1054, %v1055
    %v1057 = vrot.slane %v1056, 4
    %v1058 = vadd.f32 %v1056, %v1057
    %v1059 = vrot.slane %v1058, 2
    %v1060 = vadd.f32 %v1058, %v1059
    %v1061 = vrot.slane %v1060, 1
    %v1062 = vadd.f32 %v1060, %v1061
    %v1063 = vsel %vm971, %v868, 0.0
    %v1064 = vsel %vm971, %v870, 0.0
    %v1065 = vadd.f32 %v1063, %v1064
    %v1066 = vsel %vm971, %v872, 0.0
    %v1067 = vadd.f32 %v1065, %v1066
    %v1068 = vsel %vm971, %v874, 0.0
    %v1069 = vadd.f32 %v1067, %v1068
    %v1070 = vrot.slane %v1069, 4
    %v1071 = vadd.f32 %v1069, %v1070
    %v1072 = vrot.slane %v1071, 2
    %v1073 = vadd.f32 %v1071, %v1072
    %v1074 = vrot.slane %v1073, 1
    %v1075 = vadd.f32 %v1073, %v1074
    %v1076 = vsel %vm971, %v876, 0.0
    %v1077 = vsel %vm971, %v878, 0.0
    %v1078 = vadd.f32 %v1076, %v1077
    %v1079 = vsel %vm971, %v880, 0.0
    %v1080 = vadd.f32 %v1078, %v1079
    %v1081 = vsel %vm971, %v882, 0.0
    %v1082 = vadd.f32 %v1080, %v1081
    %v1083 = vrot.slane %v1082, 4
    %v1084 = vadd.f32 %v1082, %v1083
    %v1085 = vrot.slane %v1084, 2
    %v1086 = vadd.f32 %v1084, %v1085
    %v1087 = vrot.slane %v1086, 1
    %v1088 = vadd.f32 %v1086, %v1087
    %v1089 = vsel %vm971, %v884, 0.0
    %v1090 = vsel %vm971, %v886, 0.0
    %v1091 = vadd.f32 %v1089, %v1090
    %v1092 = vsel %vm971, %v888, 0.0
    %v1093 = vadd.f32 %v1091, %v1092
    %v1094 = vsel %vm971, %v890, 0.0
    %v1095 = vadd.f32 %v1093, %v1094
    %v1096 = vrot.slane %v1095, 4
    %v1097 = vadd.f32 %v1095, %v1096
    %v1098 = vrot.slane %v1097, 2
    %v1099 = vadd.f32 %v1097, %v1098
    %v1100 = vrot.slane %v1099, 1
    %v1101 = vadd.f32 %v1099, %v1100
    %v1102 = vsel %vm971, %v892, 0.0
    %v1103 = vsel %vm971, %v894, 0.0
    %v1104 = vadd.f32 %v1102, %v1103
    %v1105 = vsel %vm971, %v896, 0.0
    %v1106 = vadd.f32 %v1104, %v1105
    %v1107 = vsel %vm971, %v898, 0.0
    %v1108 = vadd.f32 %v1106, %v1107
    %v1109 = vrot.slane %v1108, 4
    %v1110 = vadd.f32 %v1108, %v1109
    %v1111 = vrot.slane %v1110, 2
    %v1112 = vadd.f32 %v1110, %v1111
    %v1113 = vrot.slane %v1112, 1
    %v1114 = vadd.f32 %v1112, %v1113
    %v1115 = vsel %vm971, %v900, 0.0
    %v1116 = vsel %vm971, %v902, 0.0
    %v1117 = vadd.f32 %v1115, %v1116
    %v1118 = vsel %vm971, %v904, 0.0
    %v1119 = vadd.f32 %v1117, %v1118
    %v1120 = vsel %vm971, %v906, 0.0
    %v1121 = vadd.f32 %v1119, %v1120
    %v1122 = vrot.slane %v1121, 4
    %v1123 = vadd.f32 %v1121, %v1122
    %v1124 = vrot.slane %v1123, 2
    %v1125 = vadd.f32 %v1123, %v1124
    %v1126 = vrot.slane %v1125, 1
    %v1127 = vadd.f32 %v1125, %v1126
    %v1128 = vsel %vm971, %v908, 0.0
    %v1129 = vsel %vm971, %v910, 0.0
    %v1130 = vadd.f32 %v1128, %v1129
    %v1131 = vsel %vm971, %v912, 0.0
    %v1132 = vadd.f32 %v1130, %v1131
    %v1133 = vsel %vm971, %v914, 0.0
    %v1134 = vadd.f32 %v1132, %v1133
    %v1135 = vrot.slane %v1134, 4
    %v1136 = vadd.f32 %v1134, %v1135
    %v1137 = vrot.slane %v1136, 2
    %v1138 = vadd.f32 %v1136, %v1137
    %v1139 = vrot.slane %v1138, 1
    %v1140 = vadd.f32 %v1138, %v1139
    %v1141 = vsel %vm971, %v916, 0.0
    %v1142 = vsel %vm971, %v918, 0.0
    %v1143 = vadd.f32 %v1141, %v1142
    %v1144 = vsel %vm971, %v920, 0.0
    %v1145 = vadd.f32 %v1143, %v1144
    %v1146 = vsel %vm971, %v922, 0.0
    %v1147 = vadd.f32 %v1145, %v1146
    %v1148 = vrot.slane %v1147, 4
    %v1149 = vadd.f32 %v1147, %v1148
    %v1150 = vrot.slane %v1149, 2
    %v1151 = vadd.f32 %v1149, %v1150
    %v1152 = vrot.slane %v1151, 1
    %v1153 = vadd.f32 %v1151, %v1152
    %v1154 = vsel %vm971, %v924, 0.0
    %v1155 = vsel %vm971, %v926, 0.0
    %v1156 = vadd.f32 %v1154, %v1155
    %v1157 = vsel %vm971, %v928, 0.0
    %v1158 = vadd.f32 %v1156, %v1157
    %v1159 = vsel %vm971, %v930, 0.0
    %v1160 = vadd.f32 %v1158, %v1159
    %v1161 = vrot.slane %v1160, 4
    %v1162 = vadd.f32 %v1160, %v1161
    %v1163 = vrot.slane %v1162, 2
    %v1164 = vadd.f32 %v1162, %v1163
    %v1165 = vrot.slane %v1164, 1
    %v1166 = vadd.f32 %v1164, %v1165
    %v1167 = vsel %vm971, %v932, 0.0
    %v1168 = vsel %vm971, %v934, 0.0
    %v1169 = vadd.f32 %v1167, %v1168
    %v1170 = vsel %vm971, %v936, 0.0
    %v1171 = vadd.f32 %v1169, %v1170
    %v1172 = vsel %vm971, %v938, 0.0
    %v1173 = vadd.f32 %v1171, %v1172
    %v1174 = vrot.slane %v1173, 4
    %v1175 = vadd.f32 %v1173, %v1174
    %v1176 = vrot.slane %v1175, 2
    %v1177 = vadd.f32 %v1175, %v1176
    %v1178 = vrot.slane %v1177, 1
    %v1179 = vadd.f32 %v1177, %v1178
    %v1180 = vadd.f32 %v955, %v984
    %v1181 = vadd.f32 %v956, %v997
    %v1182 = vadd.f32 %v957, %v1010
    %v1183 = vadd.f32 %v958, %v1023
    %v1184 = vadd.f32 %v959, %v1036
    %v1185 = vadd.f32 %v960, %v1049
    %v1186 = vadd.f32 %v961, %v1062
    %v1187 = vadd.f32 %v962, %v1075
    %v1188 = vadd.f32 %v963, %v1088
    %v1189 = vadd.f32 %v964, %v1101
    %v1190 = vadd.f32 %v965, %v1114
    %v1191 = vadd.f32 %v966, %v1127
    %v1192 = vadd.f32 %v967, %v1140
    %v1193 = vadd.f32 %v968, %v1153
    %v1194 = vadd.f32 %v969, %v1166
    %v1195 = vadd.f32 %v970, %v1179
    %vm1196 = vcmask 0
    %1197 = vst.msk [vmem:[#allocation3] sm:$0x1] %vm1196, %v1180
    %1198 = vst.msk [vmem:[#allocation3 + $0x1] sm:$0x1] %vm1196, %v1181
    %1199 = vst.msk [vmem:[#allocation3 + $0x2] sm:$0x1] %vm1196, %v1182
    %1200 = vst.msk [vmem:[#allocation3 + $0x3] sm:$0x1] %vm1196, %v1183
    %1201 = vst.msk [vmem:[#allocation3 + $0x4] sm:$0x1] %vm1196, %v1184
    %1202 = vst.msk [vmem:[#allocation3 + $0x5] sm:$0x1] %vm1196, %v1185
    %1203 = vst.msk [vmem:[#allocation3 + $0x6] sm:$0x1] %vm1196, %v1186
    %1204 = vst.msk [vmem:[#allocation3 + $0x7] sm:$0x1] %vm1196, %v1187
    %1205 = vst.msk [vmem:[#allocation3 + $0x8] sm:$0x1] %vm1196, %v1188
    %1206 = vst.msk [vmem:[#allocation3 + $0x9] sm:$0x1] %vm1196, %v1189
    %1207 = vst.msk [vmem:[#allocation3 + $0xa] sm:$0x1] %vm1196, %v1190
    %1208 = vst.msk [vmem:[#allocation3 + $0xb] sm:$0x1] %vm1196, %v1191
    %1209 = vst.msk [vmem:[#allocation3 + $0xc] sm:$0x1] %vm1196, %v1192
    %1210 = vst.msk [vmem:[#allocation3 + $0xd] sm:$0x1] %vm1196, %v1193
    %1211 = vst.msk [vmem:[#allocation3 + $0xe] sm:$0x1] %vm1196, %v1194
    %1212 = vst.msk [vmem:[#allocation3 + $0xf] sm:$0x1] %vm1196, %v1195
    %v1213 = vld [vmem:[#allocation4] sm:$0x1]
    %v1214 = vld [vmem:[#allocation4 + $0x1] sm:$0x1]
    %v1215 = vld [vmem:[#allocation4 + $0x2] sm:$0x1]
    %v1216 = vld [vmem:[#allocation4 + $0x3] sm:$0x1]
    %v1217 = vld [vmem:[#allocation4 + $0x4] sm:$0x1]
    %v1218 = vld [vmem:[#allocation4 + $0x5] sm:$0x1]
    %v1219 = vld [vmem:[#allocation4 + $0x6] sm:$0x1]
    %v1220 = vld [vmem:[#allocation4 + $0x7] sm:$0x1]
    %v1221 = vld [vmem:[#allocation4 + $0x8] sm:$0x1]
    %v1222 = vld [vmem:[#allocation4 + $0x9] sm:$0x1]
    %v1223 = vld [vmem:[#allocation4 + $0xa] sm:$0x1]
    %v1224 = vld [vmem:[#allocation4 + $0xb] sm:$0x1]
    %v1225 = vld [vmem:[#allocation4 + $0xc] sm:$0x1]
    %v1226 = vld [vmem:[#allocation4 + $0xd] sm:$0x1]
    %v1227 = vld [vmem:[#allocation4 + $0xe] sm:$0x1]
    %v1228 = vld [vmem:[#allocation4 + $0xf] sm:$0x1]
    %1230 = vset.pattern.permute.xlu0 0
    %1231 = vperm.xlu0 %1230, %v620
    %v1232 = vpop.permute.xlu0 %1231
    %v1234 = vlaneseq
    %v1235 = vshrl.u32 %v1234, 7
    %v1236 = vsub.s32 0, %v1235
    %v1237 = vrot.slane %v1232, %v1236
    %1239 = vset.pattern.permute.xlu0 0
    %1240 = vperm.xlu0 %1239, %v622
    %v1241 = vpop.permute.xlu0 %1240
    %v1243 = vlaneseq
    %v1244 = vshrl.u32 %v1243, 7
    %v1245 = vsub.s32 0, %v1244
    %v1246 = vrot.slane %v1241, %v1245
    %1248 = vset.pattern.permute.xlu0 0
    %1249 = vperm.xlu0 %1248, %v624
    %v1250 = vpop.permute.xlu0 %1249
    %v1252 = vlaneseq
    %v1253 = vshrl.u32 %v1252, 7
    %v1254 = vsub.s32 0, %v1253
    %v1255 = vrot.slane %v1250, %v1254
    %1257 = vset.pattern.permute.xlu0 0
    %1258 = vperm.xlu0 %1257, %v626
    %v1259 = vpop.permute.xlu0 %1258
    %v1261 = vlaneseq
    %v1262 = vshrl.u32 %v1261, 7
    %v1263 = vsub.s32 0, %v1262
    %v1264 = vrot.slane %v1259, %v1263
    %1266 = vset.pattern.permute.xlu0 0
    %1267 = vperm.xlu0 %1266, %v628
    %v1268 = vpop.permute.xlu0 %1267
    %v1270 = vlaneseq
    %v1271 = vshrl.u32 %v1270, 7
    %v1272 = vsub.s32 0, %v1271
    %v1273 = vrot.slane %v1268, %v1272
    %1275 = vset.pattern.permute.xlu0 0
    %1276 = vperm.xlu0 %1275, %v630
    %v1277 = vpop.permute.xlu0 %1276
    %v1279 = vlaneseq
    %v1280 = vshrl.u32 %v1279, 7
    %v1281 = vsub.s32 0, %v1280
    %v1282 = vrot.slane %v1277, %v1281
    %1284 = vset.pattern.permute.xlu0 0
    %1285 = vperm.xlu0 %1284, %v632
    %v1286 = vpop.permute.xlu0 %1285
    %v1288 = vlaneseq
    %v1289 = vshrl.u32 %v1288, 7
    %v1290 = vsub.s32 0, %v1289
    %v1291 = vrot.slane %v1286, %v1290
    %1293 = vset.pattern.permute.xlu0 0
    %1294 = vperm.xlu0 %1293, %v634
    %v1295 = vpop.permute.xlu0 %1294
    %v1297 = vlaneseq
    %v1298 = vshrl.u32 %v1297, 7
    %v1299 = vsub.s32 0, %v1298
    %v1300 = vrot.slane %v1295, %v1299
    %1302 = vset.pattern.permute.xlu0 0
    %1303 = vperm.xlu0 %1302, %v636
    %v1304 = vpop.permute.xlu0 %1303
    %v1306 = vlaneseq
    %v1307 = vshrl.u32 %v1306, 7
    %v1308 = vsub.s32 0, %v1307
    %v1309 = vrot.slane %v1304, %v1308
    %1311 = vset.pattern.permute.xlu0 0
    %1312 = vperm.xlu0 %1311, %v638
    %v1313 = vpop.permute.xlu0 %1312
    %v1315 = vlaneseq
    %v1316 = vshrl.u32 %v1315, 7
    %v1317 = vsub.s32 0, %v1316
    %v1318 = vrot.slane %v1313, %v1317
    %1320 = vset.pattern.permute.xlu0 0
    %1321 = vperm.xlu0 %1320, %v640
    %v1322 = vpop.permute.xlu0 %1321
    %v1324 = vlaneseq
    %v1325 = vshrl.u32 %v1324, 7
    %v1326 = vsub.s32 0, %v1325
    %v1327 = vrot.slane %v1322, %v1326
    %1329 = vset.pattern.permute.xlu0 0
    %1330 = vperm.xlu0 %1329, %v642
    %v1331 = vpop.permute.xlu0 %1330
    %v1333 = vlaneseq
    %v1334 = vshrl.u32 %v1333, 7
    %v1335 = vsub.s32 0, %v1334
    %v1336 = vrot.slane %v1331, %v1335
    %1338 = vset.pattern.permute.xlu0 0
    %1339 = vperm.xlu0 %1338, %v644
    %v1340 = vpop.permute.xlu0 %1339
    %v1342 = vlaneseq
    %v1343 = vshrl.u32 %v1342, 7
    %v1344 = vsub.s32 0, %v1343
    %v1345 = vrot.slane %v1340, %v1344
    %1347 = vset.pattern.permute.xlu0 0
    %1348 = vperm.xlu0 %1347, %v646
    %v1349 = vpop.permute.xlu0 %1348
    %v1351 = vlaneseq
    %v1352 = vshrl.u32 %v1351, 7
    %v1353 = vsub.s32 0, %v1352
    %v1354 = vrot.slane %v1349, %v1353
    %1356 = vset.pattern.permute.xlu0 0
    %1357 = vperm.xlu0 %1356, %v648
    %v1358 = vpop.permute.xlu0 %1357
    %v1360 = vlaneseq
    %v1361 = vshrl.u32 %v1360, 7
    %v1362 = vsub.s32 0, %v1361
    %v1363 = vrot.slane %v1358, %v1362
    %1365 = vset.pattern.permute.xlu0 0
    %1366 = vperm.xlu0 %1365, %v650
    %v1367 = vpop.permute.xlu0 %1366
    %v1369 = vlaneseq
    %v1370 = vshrl.u32 %v1369, 7
    %v1371 = vsub.s32 0, %v1370
    %v1372 = vrot.slane %v1367, %v1371
    %v1373 = vmul.f32 %v1237, %v1213
    %v1374 = vmul.f32 %v1246, %v1214
    %v1375 = vmul.f32 %v1255, %v1215
    %v1376 = vmul.f32 %v1264, %v1216
    %v1377 = vmul.f32 %v1273, %v1217
    %v1378 = vmul.f32 %v1282, %v1218
    %v1379 = vmul.f32 %v1291, %v1219
    %v1380 = vmul.f32 %v1300, %v1220
    %v1381 = vmul.f32 %v1309, %v1221
    %v1382 = vmul.f32 %v1318, %v1222
    %v1383 = vmul.f32 %v1327, %v1223
    %v1384 = vmul.f32 %v1336, %v1224
    %v1385 = vmul.f32 %v1345, %v1225
    %v1386 = vmul.f32 %v1354, %v1226
    %v1387 = vmul.f32 %v1363, %v1227
    %v1388 = vmul.f32 %v1372, %v1228
    %1390 = vset.pattern.permute.xlu0 0
    %1391 = vperm.xlu0 %1390, %v812
    %v1392 = vpop.permute.xlu0 %1391
    %1395 = vset.pattern.permute.xlu0 0
    %1396 = vperm.xlu0 %1395, %v814
    %v1397 = vpop.permute.xlu0 %1396
    %1400 = vset.pattern.permute.xlu0 0
    %1401 = vperm.xlu0 %1400, %v816
    %v1402 = vpop.permute.xlu0 %1401
    %1405 = vset.pattern.permute.xlu0 0
    %1406 = vperm.xlu0 %1405, %v818
    %v1407 = vpop.permute.xlu0 %1406
    %1410 = vset.pattern.permute.xlu0 0
    %1411 = vperm.xlu0 %1410, %v820
    %v1412 = vpop.permute.xlu0 %1411
    %1415 = vset.pattern.permute.xlu0 0
    %1416 = vperm.xlu0 %1415, %v822
    %v1417 = vpop.permute.xlu0 %1416
    %1420 = vset.pattern.permute.xlu0 0
    %1421 = vperm.xlu0 %1420, %v824
    %v1422 = vpop.permute.xlu0 %1421
    %1425 = vset.pattern.permute.xlu0 0
    %1426 = vperm.xlu0 %1425, %v826
    %v1427 = vpop.permute.xlu0 %1426
    %1430 = vset.pattern.permute.xlu0 0
    %1431 = vperm.xlu0 %1430, %v828
    %v1432 = vpop.permute.xlu0 %1431
    %1435 = vset.pattern.permute.xlu0 0
    %1436 = vperm.xlu0 %1435, %v830
    %v1437 = vpop.permute.xlu0 %1436
    %1440 = vset.pattern.permute.xlu0 0
    %1441 = vperm.xlu0 %1440, %v832
    %v1442 = vpop.permute.xlu0 %1441
    %1445 = vset.pattern.permute.xlu0 0
    %1446 = vperm.xlu0 %1445, %v834
    %v1447 = vpop.permute.xlu0 %1446
    %1450 = vset.pattern.permute.xlu0 0
    %1451 = vperm.xlu0 %1450, %v836
    %v1452 = vpop.permute.xlu0 %1451
    %1455 = vset.pattern.permute.xlu0 0
    %1456 = vperm.xlu0 %1455, %v838
    %v1457 = vpop.permute.xlu0 %1456
    %1460 = vset.pattern.permute.xlu0 0
    %1461 = vperm.xlu0 %1460, %v840
    %v1462 = vpop.permute.xlu0 %1461
    %1465 = vset.pattern.permute.xlu0 0
    %1466 = vperm.xlu0 %1465, %v842
    %v1467 = vpop.permute.xlu0 %1466
    %1470 = vset.pattern.permute.xlu0 0
    %1471 = vperm.xlu0 %1470, %v844
    %v1472 = vpop.permute.xlu0 %1471
    %1475 = vset.pattern.permute.xlu0 0
    %1476 = vperm.xlu0 %1475, %v846
    %v1477 = vpop.permute.xlu0 %1476
    %1480 = vset.pattern.permute.xlu0 0
    %1481 = vperm.xlu0 %1480, %v848
    %v1482 = vpop.permute.xlu0 %1481
    %1485 = vset.pattern.permute.xlu0 0
    %1486 = vperm.xlu0 %1485, %v850
    %v1487 = vpop.permute.xlu0 %1486
    %1490 = vset.pattern.permute.xlu0 0
    %1491 = vperm.xlu0 %1490, %v852
    %v1492 = vpop.permute.xlu0 %1491
    %1495 = vset.pattern.permute.xlu0 0
    %1496 = vperm.xlu0 %1495, %v854
    %v1497 = vpop.permute.xlu0 %1496
    %1500 = vset.pattern.permute.xlu0 0
    %1501 = vperm.xlu0 %1500, %v856
    %v1502 = vpop.permute.xlu0 %1501
    %1505 = vset.pattern.permute.xlu0 0
    %1506 = vperm.xlu0 %1505, %v858
    %v1507 = vpop.permute.xlu0 %1506
    %1510 = vset.pattern.permute.xlu0 0
    %1511 = vperm.xlu0 %1510, %v860
    %v1512 = vpop.permute.xlu0 %1511
    %1515 = vset.pattern.permute.xlu0 0
    %1516 = vperm.xlu0 %1515, %v862
    %v1517 = vpop.permute.xlu0 %1516
    %1520 = vset.pattern.permute.xlu0 0
    %1521 = vperm.xlu0 %1520, %v864
    %v1522 = vpop.permute.xlu0 %1521
    %1525 = vset.pattern.permute.xlu0 0
    %1526 = vperm.xlu0 %1525, %v866
    %v1527 = vpop.permute.xlu0 %1526
    %1530 = vset.pattern.permute.xlu0 0
    %1531 = vperm.xlu0 %1530, %v868
    %v1532 = vpop.permute.xlu0 %1531
    %1535 = vset.pattern.permute.xlu0 0
    %1536 = vperm.xlu0 %1535, %v870
    %v1537 = vpop.permute.xlu0 %1536
    %1540 = vset.pattern.permute.xlu0 0
    %1541 = vperm.xlu0 %1540, %v872
    %v1542 = vpop.permute.xlu0 %1541
    %1545 = vset.pattern.permute.xlu0 0
    %1546 = vperm.xlu0 %1545, %v874
    %v1547 = vpop.permute.xlu0 %1546
    %1550 = vset.pattern.permute.xlu0 0
    %1551 = vperm.xlu0 %1550, %v876
    %v1552 = vpop.permute.xlu0 %1551
    %1555 = vset.pattern.permute.xlu0 0
    %1556 = vperm.xlu0 %1555, %v878
    %v1557 = vpop.permute.xlu0 %1556
    %1560 = vset.pattern.permute.xlu0 0
    %1561 = vperm.xlu0 %1560, %v880
    %v1562 = vpop.permute.xlu0 %1561
    %1565 = vset.pattern.permute.xlu0 0
    %1566 = vperm.xlu0 %1565, %v882
    %v1567 = vpop.permute.xlu0 %1566
    %1570 = vset.pattern.permute.xlu0 0
    %1571 = vperm.xlu0 %1570, %v884
    %v1572 = vpop.permute.xlu0 %1571
    %1575 = vset.pattern.permute.xlu0 0
    %1576 = vperm.xlu0 %1575, %v886
    %v1577 = vpop.permute.xlu0 %1576
    %1580 = vset.pattern.permute.xlu0 0
    %1581 = vperm.xlu0 %1580, %v888
    %v1582 = vpop.permute.xlu0 %1581
    %1585 = vset.pattern.permute.xlu0 0
    %1586 = vperm.xlu0 %1585, %v890
    %v1587 = vpop.permute.xlu0 %1586
    %1590 = vset.pattern.permute.xlu0 0
    %1591 = vperm.xlu0 %1590, %v892
    %v1592 = vpop.permute.xlu0 %1591
    %1595 = vset.pattern.permute.xlu0 0
    %1596 = vperm.xlu0 %1595, %v894
    %v1597 = vpop.permute.xlu0 %1596
    %1600 = vset.pattern.permute.xlu0 0
    %1601 = vperm.xlu0 %1600, %v896
    %v1602 = vpop.permute.xlu0 %1601
    %1605 = vset.pattern.permute.xlu0 0
    %1606 = vperm.xlu0 %1605, %v898
    %v1607 = vpop.permute.xlu0 %1606
    %1610 = vset.pattern.permute.xlu0 0
    %1611 = vperm.xlu0 %1610, %v900
    %v1612 = vpop.permute.xlu0 %1611
    %1615 = vset.pattern.permute.xlu0 0
    %1616 = vperm.xlu0 %1615, %v902
    %v1617 = vpop.permute.xlu0 %1616
    %1620 = vset.pattern.permute.xlu0 0
    %1621 = vperm.xlu0 %1620, %v904
    %v1622 = vpop.permute.xlu0 %1621
    %1625 = vset.pattern.permute.xlu0 0
    %1626 = vperm.xlu0 %1625, %v906
    %v1627 = vpop.permute.xlu0 %1626
    %1630 = vset.pattern.permute.xlu0 0
    %1631 = vperm.xlu0 %1630, %v908
    %v1632 = vpop.permute.xlu0 %1631
    %1635 = vset.pattern.permute.xlu0 0
    %1636 = vperm.xlu0 %1635, %v910
    %v1637 = vpop.permute.xlu0 %1636
    %1640 = vset.pattern.permute.xlu0 0
    %1641 = vperm.xlu0 %1640, %v912
    %v1642 = vpop.permute.xlu0 %1641
    %1645 = vset.pattern.permute.xlu0 0
    %1646 = vperm.xlu0 %1645, %v914
    %v1647 = vpop.permute.xlu0 %1646
    %1650 = vset.pattern.permute.xlu0 0
    %1651 = vperm.xlu0 %1650, %v916
    %v1652 = vpop.permute.xlu0 %1651
    %1655 = vset.pattern.permute.xlu0 0
    %1656 = vperm.xlu0 %1655, %v918
    %v1657 = vpop.permute.xlu0 %1656
    %1660 = vset.pattern.permute.xlu0 0
    %1661 = vperm.xlu0 %1660, %v920
    %v1662 = vpop.permute.xlu0 %1661
    %1665 = vset.pattern.permute.xlu0 0
    %1666 = vperm.xlu0 %1665, %v922
    %v1667 = vpop.permute.xlu0 %1666
    %1670 = vset.pattern.permute.xlu0 0
    %1671 = vperm.xlu0 %1670, %v924
    %v1672 = vpop.permute.xlu0 %1671
    %1675 = vset.pattern.permute.xlu0 0
    %1676 = vperm.xlu0 %1675, %v926
    %v1677 = vpop.permute.xlu0 %1676
    %1680 = vset.pattern.permute.xlu0 0
    %1681 = vperm.xlu0 %1680, %v928
    %v1682 = vpop.permute.xlu0 %1681
    %1685 = vset.pattern.permute.xlu0 0
    %1686 = vperm.xlu0 %1685, %v930
    %v1687 = vpop.permute.xlu0 %1686
    %1690 = vset.pattern.permute.xlu0 0
    %1691 = vperm.xlu0 %1690, %v932
    %v1692 = vpop.permute.xlu0 %1691
    %1695 = vset.pattern.permute.xlu0 0
    %1696 = vperm.xlu0 %1695, %v934
    %v1697 = vpop.permute.xlu0 %1696
    %1700 = vset.pattern.permute.xlu0 0
    %1701 = vperm.xlu0 %1700, %v936
    %v1702 = vpop.permute.xlu0 %1701
    %1705 = vset.pattern.permute.xlu0 0
    %1706 = vperm.xlu0 %1705, %v938
    %v1707 = vpop.permute.xlu0 %1706
    %v1709 = vmul.f32 %v1392, %v164
    %v1710 = vmul.f32 %v1397, %v165
    %v1711 = vmul.f32 %v1402, %v166
    %v1712 = vmul.f32 %v1407, %v167
    %v1713 = vmul.f32 %v1412, %v168
    %v1714 = vmul.f32 %v1417, %v169
    %v1715 = vmul.f32 %v1422, %v170
    %v1716 = vmul.f32 %v1427, %v171
    %v1717 = vmul.f32 %v1432, %v172
    %v1718 = vmul.f32 %v1437, %v173
    %v1719 = vmul.f32 %v1442, %v174
    %v1720 = vmul.f32 %v1447, %v175
    %v1721 = vmul.f32 %v1452, %v176
    %v1722 = vmul.f32 %v1457, %v177
    %v1723 = vmul.f32 %v1462, %v178
    %v1724 = vmul.f32 %v1467, %v179
    %v1725 = vmul.f32 %v1472, %v180
    %v1726 = vmul.f32 %v1477, %v181
    %v1727 = vmul.f32 %v1482, %v182
    %v1728 = vmul.f32 %v1487, %v183
    %v1729 = vmul.f32 %v1492, %v184
    %v1730 = vmul.f32 %v1497, %v185
    %v1731 = vmul.f32 %v1502, %v186
    %v1732 = vmul.f32 %v1507, %v187
    %v1733 = vmul.f32 %v1512, %v188
    %v1734 = vmul.f32 %v1517, %v189
    %v1735 = vmul.f32 %v1522, %v190
    %v1736 = vmul.f32 %v1527, %v191
    %v1737 = vmul.f32 %v1532, %v192
    %v1738 = vmul.f32 %v1537, %v193
    %v1739 = vmul.f32 %v1542, %v194
    %v1740 = vmul.f32 %v1547, %v195
    %v1741 = vmul.f32 %v1552, %v196
    %v1742 = vmul.f32 %v1557, %v197
    %v1743 = vmul.f32 %v1562, %v198
    %v1744 = vmul.f32 %v1567, %v199
    %v1745 = vmul.f32 %v1572, %v200
    %v1746 = vmul.f32 %v1577, %v201
    %v1747 = vmul.f32 %v1582, %v202
    %v1748 = vmul.f32 %v1587, %v203
    %v1749 = vmul.f32 %v1592, %v204
    %v1750 = vmul.f32 %v1597, %v205
    %v1751 = vmul.f32 %v1602, %v206
    %v1752 = vmul.f32 %v1607, %v207
    %v1753 = vmul.f32 %v1612, %v208
    %v1754 = vmul.f32 %v1617, %v209
    %v1755 = vmul.f32 %v1622, %v210
    %v1756 = vmul.f32 %v1627, %v211
    %v1757 = vmul.f32 %v1632, %v212
    %v1758 = vmul.f32 %v1637, %v213
    %v1759 = vmul.f32 %v1642, %v214
    %v1760 = vmul.f32 %v1647, %v215
    %v1761 = vmul.f32 %v1652, %v216
    %v1762 = vmul.f32 %v1657, %v217
    %v1763 = vmul.f32 %v1662, %v218
    %v1764 = vmul.f32 %v1667, %v219
    %v1765 = vmul.f32 %v1672, %v220
    %v1766 = vmul.f32 %v1677, %v221
    %v1767 = vmul.f32 %v1682, %v222
    %v1768 = vmul.f32 %v1687, %v223
    %v1769 = vmul.f32 %v1692, %v224
    %v1770 = vmul.f32 %v1697, %v225
    %v1771 = vmul.f32 %v1702, %v226
    %v1772 = vmul.f32 %v1707, %v227
    %v1773 = vadd.f32 %v1709, %v1710
    %v1774 = vadd.f32 %v1773, %v1711
    %v1775 = vadd.f32 %v1774, %v1712
    %v1776 = vrot.slane %v1775, 4
    %v1777 = vadd.f32 %v1775, %v1776
    %v1778 = vrot.slane %v1777, 2
    %v1779 = vadd.f32 %v1777, %v1778
    %v1780 = vrot.slane %v1779, 1
    %v1781 = vadd.f32 %v1779, %v1780
    %v1782 = vadd.f32 %v1713, %v1714
    %v1783 = vadd.f32 %v1782, %v1715
    %v1784 = vadd.f32 %v1783, %v1716
    %v1785 = vrot.slane %v1784, 4
    %v1786 = vadd.f32 %v1784, %v1785
    %v1787 = vrot.slane %v1786, 2
    %v1788 = vadd.f32 %v1786, %v1787
    %v1789 = vrot.slane %v1788, 1
    %v1790 = vadd.f32 %v1788, %v1789
    %v1791 = vadd.f32 %v1717, %v1718
    %v1792 = vadd.f32 %v1791, %v1719
    %v1793 = vadd.f32 %v1792, %v1720
    %v1794 = vrot.slane %v1793, 4
    %v1795 = vadd.f32 %v1793, %v1794
    %v1796 = vrot.slane %v1795, 2
    %v1797 = vadd.f32 %v1795, %v1796
    %v1798 = vrot.slane %v1797, 1
    %v1799 = vadd.f32 %v1797, %v1798
    %v1800 = vadd.f32 %v1721, %v1722
    %v1801 = vadd.f32 %v1800, %v1723
    %v1802 = vadd.f32 %v1801, %v1724
    %v1803 = vrot.slane %v1802, 4
    %v1804 = vadd.f32 %v1802, %v1803
    %v1805 = vrot.slane %v1804, 2
    %v1806 = vadd.f32 %v1804, %v1805
    %v1807 = vrot.slane %v1806, 1
    %v1808 = vadd.f32 %v1806, %v1807
    %v1809 = vadd.f32 %v1725, %v1726
    %v1810 = vadd.f32 %v1809, %v1727
    %v1811 = vadd.f32 %v1810, %v1728
    %v1812 = vrot.slane %v1811, 4
    %v1813 = vadd.f32 %v1811, %v1812
    %v1814 = vrot.slane %v1813, 2
    %v1815 = vadd.f32 %v1813, %v1814
    %v1816 = vrot.slane %v1815, 1
    %v1817 = vadd.f32 %v1815, %v1816
    %v1818 = vadd.f32 %v1729, %v1730
    %v1819 = vadd.f32 %v1818, %v1731
    %v1820 = vadd.f32 %v1819, %v1732
    %v1821 = vrot.slane %v1820, 4
    %v1822 = vadd.f32 %v1820, %v1821
    %v1823 = vrot.slane %v1822, 2
    %v1824 = vadd.f32 %v1822, %v1823
    %v1825 = vrot.slane %v1824, 1
    %v1826 = vadd.f32 %v1824, %v1825
    %v1827 = vadd.f32 %v1733, %v1734
    %v1828 = vadd.f32 %v1827, %v1735
    %v1829 = vadd.f32 %v1828, %v1736
    %v1830 = vrot.slane %v1829, 4
    %v1831 = vadd.f32 %v1829, %v1830
    %v1832 = vrot.slane %v1831, 2
    %v1833 = vadd.f32 %v1831, %v1832
    %v1834 = vrot.slane %v1833, 1
    %v1835 = vadd.f32 %v1833, %v1834
    %v1836 = vadd.f32 %v1737, %v1738
    %v1837 = vadd.f32 %v1836, %v1739
    %v1838 = vadd.f32 %v1837, %v1740
    %v1839 = vrot.slane %v1838, 4
    %v1840 = vadd.f32 %v1838, %v1839
    %v1841 = vrot.slane %v1840, 2
    %v1842 = vadd.f32 %v1840, %v1841
    %v1843 = vrot.slane %v1842, 1
    %v1844 = vadd.f32 %v1842, %v1843
    %v1845 = vadd.f32 %v1741, %v1742
    %v1846 = vadd.f32 %v1845, %v1743
    %v1847 = vadd.f32 %v1846, %v1744
    %v1848 = vrot.slane %v1847, 4
    %v1849 = vadd.f32 %v1847, %v1848
    %v1850 = vrot.slane %v1849, 2
    %v1851 = vadd.f32 %v1849, %v1850
    %v1852 = vrot.slane %v1851, 1
    %v1853 = vadd.f32 %v1851, %v1852
    %v1854 = vadd.f32 %v1745, %v1746
    %v1855 = vadd.f32 %v1854, %v1747
    %v1856 = vadd.f32 %v1855, %v1748
    %v1857 = vrot.slane %v1856, 4
    %v1858 = vadd.f32 %v1856, %v1857
    %v1859 = vrot.slane %v1858, 2
    %v1860 = vadd.f32 %v1858, %v1859
    %v1861 = vrot.slane %v1860, 1
    %v1862 = vadd.f32 %v1860, %v1861
    %v1863 = vadd.f32 %v1749, %v1750
    %v1864 = vadd.f32 %v1863, %v1751
    %v1865 = vadd.f32 %v1864, %v1752
    %v1866 = vrot.slane %v1865, 4
    %v1867 = vadd.f32 %v1865, %v1866
    %v1868 = vrot.slane %v1867, 2
    %v1869 = vadd.f32 %v1867, %v1868
    %v1870 = vrot.slane %v1869, 1
    %v1871 = vadd.f32 %v1869, %v1870
    %v1872 = vadd.f32 %v1753, %v1754
    %v1873 = vadd.f32 %v1872, %v1755
    %v1874 = vadd.f32 %v1873, %v1756
    %v1875 = vrot.slane %v1874, 4
    %v1876 = vadd.f32 %v1874, %v1875
    %v1877 = vrot.slane %v1876, 2
    %v1878 = vadd.f32 %v1876, %v1877
    %v1879 = vrot.slane %v1878, 1
    %v1880 = vadd.f32 %v1878, %v1879
    %v1881 = vadd.f32 %v1757, %v1758
    %v1882 = vadd.f32 %v1881, %v1759
    %v1883 = vadd.f32 %v1882, %v1760
    %v1884 = vrot.slane %v1883, 4
    %v1885 = vadd.f32 %v1883, %v1884
    %v1886 = vrot.slane %v1885, 2
    %v1887 = vadd.f32 %v1885, %v1886
    %v1888 = vrot.slane %v1887, 1
    %v1889 = vadd.f32 %v1887, %v1888
    %v1890 = vadd.f32 %v1761, %v1762
    %v1891 = vadd.f32 %v1890, %v1763
    %v1892 = vadd.f32 %v1891, %v1764
    %v1893 = vrot.slane %v1892, 4
    %v1894 = vadd.f32 %v1892, %v1893
    %v1895 = vrot.slane %v1894, 2
    %v1896 = vadd.f32 %v1894, %v1895
    %v1897 = vrot.slane %v1896, 1
    %v1898 = vadd.f32 %v1896, %v1897
    %v1899 = vadd.f32 %v1765, %v1766
    %v1900 = vadd.f32 %v1899, %v1767
    %v1901 = vadd.f32 %v1900, %v1768
    %v1902 = vrot.slane %v1901, 4
    %v1903 = vadd.f32 %v1901, %v1902
    %v1904 = vrot.slane %v1903, 2
    %v1905 = vadd.f32 %v1903, %v1904
    %v1906 = vrot.slane %v1905, 1
    %v1907 = vadd.f32 %v1905, %v1906
    %v1908 = vadd.f32 %v1769, %v1770
    %v1909 = vadd.f32 %v1908, %v1771
    %v1910 = vadd.f32 %v1909, %v1772
    %v1911 = vrot.slane %v1910, 4
    %v1912 = vadd.f32 %v1910, %v1911
    %v1913 = vrot.slane %v1912, 2
    %v1914 = vadd.f32 %v1912, %v1913
    %v1915 = vrot.slane %v1914, 1
    %v1916 = vadd.f32 %v1914, %v1915
    %v1917 = vadd.f32 %v1373, %v1781
    %v1918 = vadd.f32 %v1374, %v1790
    %v1919 = vadd.f32 %v1375, %v1799
    %v1920 = vadd.f32 %v1376, %v1808
    %v1921 = vadd.f32 %v1377, %v1817
    %v1922 = vadd.f32 %v1378, %v1826
    %v1923 = vadd.f32 %v1379, %v1835
    %v1924 = vadd.f32 %v1380, %v1844
    %v1925 = vadd.f32 %v1381, %v1853
    %v1926 = vadd.f32 %v1382, %v1862
    %v1927 = vadd.f32 %v1383, %v1871
    %v1928 = vadd.f32 %v1384, %v1880
    %v1929 = vadd.f32 %v1385, %v1889
    %v1930 = vadd.f32 %v1386, %v1898
    %v1931 = vadd.f32 %v1387, %v1907
    %v1932 = vadd.f32 %v1388, %v1916
    %1933 = vst [vmem:[#allocation4] sm:$0x1] %v1917
    %1934 = vst [vmem:[#allocation4 + $0x1] sm:$0x1] %v1918
    %1935 = vst [vmem:[#allocation4 + $0x2] sm:$0x1] %v1919
    %1936 = vst [vmem:[#allocation4 + $0x3] sm:$0x1] %v1920
    %1937 = vst [vmem:[#allocation4 + $0x4] sm:$0x1] %v1921
    %1938 = vst [vmem:[#allocation4 + $0x5] sm:$0x1] %v1922
    %1939 = vst [vmem:[#allocation4 + $0x6] sm:$0x1] %v1923
    %1940 = vst [vmem:[#allocation4 + $0x7] sm:$0x1] %v1924
    %1941 = vst [vmem:[#allocation4 + $0x8] sm:$0x1] %v1925
    %1942 = vst [vmem:[#allocation4 + $0x9] sm:$0x1] %v1926
    %1943 = vst [vmem:[#allocation4 + $0xa] sm:$0x1] %v1927
    %1944 = vst [vmem:[#allocation4 + $0xb] sm:$0x1] %v1928
    %1945 = vst [vmem:[#allocation4 + $0xc] sm:$0x1] %v1929
    %1946 = vst [vmem:[#allocation4 + $0xd] sm:$0x1] %v1930
    %1947 = vst [vmem:[#allocation4 + $0xe] sm:$0x1] %v1931
    %1948 = vst [vmem:[#allocation4 + $0xf] sm:$0x1] %v1932
    %1949 = vst.msk [vmem:[#allocation2] sm:$0x1] %vm1196, %v587
    %1950 = vst.msk [vmem:[#allocation2 + $0x1] sm:$0x1] %vm1196, %v588
    %1951 = vst.msk [vmem:[#allocation2 + $0x2] sm:$0x1] %vm1196, %v589
    %1952 = vst.msk [vmem:[#allocation2 + $0x3] sm:$0x1] %vm1196, %v590
    %1953 = vst.msk [vmem:[#allocation2 + $0x4] sm:$0x1] %vm1196, %v591
    %1954 = vst.msk [vmem:[#allocation2 + $0x5] sm:$0x1] %vm1196, %v592
    %1955 = vst.msk [vmem:[#allocation2 + $0x6] sm:$0x1] %vm1196, %v593
    %1956 = vst.msk [vmem:[#allocation2 + $0x7] sm:$0x1] %vm1196, %v594
    %1957 = vst.msk [vmem:[#allocation2 + $0x8] sm:$0x1] %vm1196, %v595
    %1958 = vst.msk [vmem:[#allocation2 + $0x9] sm:$0x1] %vm1196, %v596
    %1959 = vst.msk [vmem:[#allocation2 + $0xa] sm:$0x1] %vm1196, %v597
    %1960 = vst.msk [vmem:[#allocation2 + $0xb] sm:$0x1] %vm1196, %v598
    %1961 = vst.msk [vmem:[#allocation2 + $0xc] sm:$0x1] %vm1196, %v599
    %1962 = vst.msk [vmem:[#allocation2 + $0xd] sm:$0x1] %vm1196, %v600
    %1963 = vst.msk [vmem:[#allocation2 + $0xe] sm:$0x1] %vm1196, %v601
    %1964 = vst.msk [vmem:[#allocation2 + $0xf] sm:$0x1] %vm1196, %v602
    // Predicated region
    $region30: #{tpu_custom_call.1} parent=1 // pred_check
      %p1965 = pneg %p47
    $region31: #{tpu_custom_call.1} parent=1 // pred_check_branch
      %1967 = sbr.rel (%p1965) target = $region33
    $region32: #{tpu_custom_call.1} parent=1 // pred_region
      %v1968 = vld [vmem:[#allocation3] sm:$0x1]
      %v1969 = vld [vmem:[#allocation3 + $0x1] sm:$0x1]
      %v1970 = vld [vmem:[#allocation3 + $0x2] sm:$0x1]
      %v1971 = vld [vmem:[#allocation3 + $0x3] sm:$0x1]
      %v1972 = vld [vmem:[#allocation3 + $0x4] sm:$0x1]
      %v1973 = vld [vmem:[#allocation3 + $0x5] sm:$0x1]
      %v1974 = vld [vmem:[#allocation3 + $0x6] sm:$0x1]
      %v1975 = vld [vmem:[#allocation3 + $0x7] sm:$0x1]
      %v1976 = vld [vmem:[#allocation3 + $0x8] sm:$0x1]
      %v1977 = vld [vmem:[#allocation3 + $0x9] sm:$0x1]
      %v1978 = vld [vmem:[#allocation3 + $0xa] sm:$0x1]
      %v1979 = vld [vmem:[#allocation3 + $0xb] sm:$0x1]
      %v1980 = vld [vmem:[#allocation3 + $0xc] sm:$0x1]
      %v1981 = vld [vmem:[#allocation3 + $0xd] sm:$0x1]
      %v1982 = vld [vmem:[#allocation3 + $0xe] sm:$0x1]
      %v1983 = vld [vmem:[#allocation3 + $0xf] sm:$0x1]
      %v1984 = vrcp.pop %v1968
      %v1985 = vrcp.pop %v1969
      %v1986 = vrcp.pop %v1970
      %v1987 = vrcp.pop %v1971
      %v1988 = vrcp.pop %v1972
      %v1989 = vrcp.pop %v1973
      %v1990 = vrcp.pop %v1974
      %v1991 = vrcp.pop %v1975
      %v1992 = vrcp.pop %v1976
      %v1993 = vrcp.pop %v1977
      %v1994 = vrcp.pop %v1978
      %v1995 = vrcp.pop %v1979
      %v1996 = vrcp.pop %v1980
      %v1997 = vrcp.pop %v1981
      %v1998 = vrcp.pop %v1982
      %v1999 = vrcp.pop %v1983
      %v2000 = vld [vmem:[#allocation4] sm:$0x1]
      %v2001 = vld [vmem:[#allocation4 + $0x1] sm:$0x1]
      %v2002 = vld [vmem:[#allocation4 + $0x2] sm:$0x1]
      %v2003 = vld [vmem:[#allocation4 + $0x3] sm:$0x1]
      %v2004 = vld [vmem:[#allocation4 + $0x4] sm:$0x1]
      %v2005 = vld [vmem:[#allocation4 + $0x5] sm:$0x1]
      %v2006 = vld [vmem:[#allocation4 + $0x6] sm:$0x1]
      %v2007 = vld [vmem:[#allocation4 + $0x7] sm:$0x1]
      %v2008 = vld [vmem:[#allocation4 + $0x8] sm:$0x1]
      %v2009 = vld [vmem:[#allocation4 + $0x9] sm:$0x1]
      %v2010 = vld [vmem:[#allocation4 + $0xa] sm:$0x1]
      %v2011 = vld [vmem:[#allocation4 + $0xb] sm:$0x1]
      %v2012 = vld [vmem:[#allocation4 + $0xc] sm:$0x1]
      %v2013 = vld [vmem:[#allocation4 + $0xd] sm:$0x1]
      %v2014 = vld [vmem:[#allocation4 + $0xe] sm:$0x1]
      %v2015 = vld [vmem:[#allocation4 + $0xf] sm:$0x1]
      %2017 = vset.pattern.permute.xlu0 0
      %2018 = vperm.xlu0 %2017, %v1984
      %v2019 = vpop.permute.xlu0 %2018
      %v2021 = vlaneseq
      %v2022 = vshrl.u32 %v2021, 7
      %v2023 = vsub.s32 0, %v2022
      %v2024 = vrot.slane %v2019, %v2023
      %2026 = vset.pattern.permute.xlu0 0
      %2027 = vperm.xlu0 %2026, %v1985
      %v2028 = vpop.permute.xlu0 %2027
      %v2030 = vlaneseq
      %v2031 = vshrl.u32 %v2030, 7
      %v2032 = vsub.s32 0, %v2031
      %v2033 = vrot.slane %v2028, %v2032
      %2035 = vset.pattern.permute.xlu0 0
      %2036 = vperm.xlu0 %2035, %v1986
      %v2037 = vpop.permute.xlu0 %2036
      %v2039 = vlaneseq
      %v2040 = vshrl.u32 %v2039, 7
      %v2041 = vsub.s32 0, %v2040
      %v2042 = vrot.slane %v2037, %v2041
      %2044 = vset.pattern.permute.xlu0 0
      %2045 = vperm.xlu0 %2044, %v1987
      %v2046 = vpop.permute.xlu0 %2045
      %v2048 = vlaneseq
      %v2049 = vshrl.u32 %v2048, 7
      %v2050 = vsub.s32 0, %v2049
      %v2051 = vrot.slane %v2046, %v2050
      %2053 = vset.pattern.permute.xlu0 0
      %2054 = vperm.xlu0 %2053, %v1988
      %v2055 = vpop.permute.xlu0 %2054
      %v2057 = vlaneseq
      %v2058 = vshrl.u32 %v2057, 7
      %v2059 = vsub.s32 0, %v2058
      %v2060 = vrot.slane %v2055, %v2059
      %2062 = vset.pattern.permute.xlu0 0
      %2063 = vperm.xlu0 %2062, %v1989
      %v2064 = vpop.permute.xlu0 %2063
      %v2066 = vlaneseq
      %v2067 = vshrl.u32 %v2066, 7
      %v2068 = vsub.s32 0, %v2067
      %v2069 = vrot.slane %v2064, %v2068
      %2071 = vset.pattern.permute.xlu0 0
      %2072 = vperm.xlu0 %2071, %v1990
      %v2073 = vpop.permute.xlu0 %2072
      %v2075 = vlaneseq
      %v2076 = vshrl.u32 %v2075, 7
      %v2077 = vsub.s32 0, %v2076
      %v2078 = vrot.slane %v2073, %v2077
      %2080 = vset.pattern.permute.xlu0 0
      %2081 = vperm.xlu0 %2080, %v1991
      %v2082 = vpop.permute.xlu0 %2081
      %v2084 = vlaneseq
      %v2085 = vshrl.u32 %v2084, 7
      %v2086 = vsub.s32 0, %v2085
      %v2087 = vrot.slane %v2082, %v2086
      %2089 = vset.pattern.permute.xlu0 0
      %2090 = vperm.xlu0 %2089, %v1992
      %v2091 = vpop.permute.xlu0 %2090
      %v2093 = vlaneseq
      %v2094 = vshrl.u32 %v2093, 7
      %v2095 = vsub.s32 0, %v2094
      %v2096 = vrot.slane %v2091, %v2095
      %2098 = vset.pattern.permute.xlu0 0
      %2099 = vperm.xlu0 %2098, %v1993
      %v2100 = vpop.permute.xlu0 %2099
      %v2102 = vlaneseq
      %v2103 = vshrl.u32 %v2102, 7
      %v2104 = vsub.s32 0, %v2103
      %v2105 = vrot.slane %v2100, %v2104
      %2107 = vset.pattern.permute.xlu0 0
      %2108 = vperm.xlu0 %2107, %v1994
      %v2109 = vpop.permute.xlu0 %2108
      %v2111 = vlaneseq
      %v2112 = vshrl.u32 %v2111, 7
      %v2113 = vsub.s32 0, %v2112
      %v2114 = vrot.slane %v2109, %v2113
      %2116 = vset.pattern.permute.xlu0 0
      %2117 = vperm.xlu0 %2116, %v1995
      %v2118 = vpop.permute.xlu0 %2117
      %v2120 = vlaneseq
      %v2121 = vshrl.u32 %v2120, 7
      %v2122 = vsub.s32 0, %v2121
      %v2123 = vrot.slane %v2118, %v2122
      %2125 = vset.pattern.permute.xlu0 0
      %2126 = vperm.xlu0 %2125, %v1996
      %v2127 = vpop.permute.xlu0 %2126
      %v2129 = vlaneseq
      %v2130 = vshrl.u32 %v2129, 7
      %v2131 = vsub.s32 0, %v2130
      %v2132 = vrot.slane %v2127, %v2131
      %2134 = vset.pattern.permute.xlu0 0
      %2135 = vperm.xlu0 %2134, %v1997
      %v2136 = vpop.permute.xlu0 %2135
      %v2138 = vlaneseq
      %v2139 = vshrl.u32 %v2138, 7
      %v2140 = vsub.s32 0, %v2139
      %v2141 = vrot.slane %v2136, %v2140
      %2143 = vset.pattern.permute.xlu0 0
      %2144 = vperm.xlu0 %2143, %v1998
      %v2145 = vpop.permute.xlu0 %2144
      %v2147 = vlaneseq
      %v2148 = vshrl.u32 %v2147, 7
      %v2149 = vsub.s32 0, %v2148
      %v2150 = vrot.slane %v2145, %v2149
      %2152 = vset.pattern.permute.xlu0 0
      %2153 = vperm.xlu0 %2152, %v1999
      %v2154 = vpop.permute.xlu0 %2153
      %v2156 = vlaneseq
      %v2157 = vshrl.u32 %v2156, 7
      %v2158 = vsub.s32 0, %v2157
      %v2159 = vrot.slane %v2154, %v2158
      %v2160 = vmul.f32 %v2000, %v2024
      %v2161 = vmul.f32 %v2001, %v2033
      %v2162 = vmul.f32 %v2002, %v2042
      %v2163 = vmul.f32 %v2003, %v2051
      %v2164 = vmul.f32 %v2004, %v2060
      %v2165 = vmul.f32 %v2005, %v2069
      %v2166 = vmul.f32 %v2006, %v2078
      %v2167 = vmul.f32 %v2007, %v2087
      %v2168 = vmul.f32 %v2008, %v2096
      %v2169 = vmul.f32 %v2009, %v2105
      %v2170 = vmul.f32 %v2010, %v2114
      %v2171 = vmul.f32 %v2011, %v2123
      %v2172 = vmul.f32 %v2012, %v2132
      %v2173 = vmul.f32 %v2013, %v2141
      %v2174 = vmul.f32 %v2014, %v2150
      %v2175 = vmul.f32 %v2015, %v2159
      %vm2176 = vcmp.gt.f32.partialorder %v2160, 0.0
      %vm2177 = vcmp.gt.f32.partialorder %v2161, 0.0
      %vm2178 = vcmp.gt.f32.partialorder %v2162, 0.0
      %vm2179 = vcmp.gt.f32.partialorder %v2163, 0.0
      %vm2180 = vcmp.gt.f32.partialorder %v2164, 0.0
      %vm2181 = vcmp.gt.f32.partialorder %v2165, 0.0
      %vm2182 = vcmp.gt.f32.partialorder %v2166, 0.0
      %vm2183 = vcmp.gt.f32.partialorder %v2167, 0.0
      %vm2184 = vcmp.gt.f32.partialorder %v2168, 0.0
      %vm2185 = vcmp.gt.f32.partialorder %v2169, 0.0
      %vm2186 = vcmp.gt.f32.partialorder %v2170, 0.0
      %vm2187 = vcmp.gt.f32.partialorder %v2171, 0.0
      %vm2188 = vcmp.gt.f32.partialorder %v2172, 0.0
      %vm2189 = vcmp.gt.f32.partialorder %v2173, 0.0
      %vm2190 = vcmp.gt.f32.partialorder %v2174, 0.0
      %vm2191 = vcmp.gt.f32.partialorder %v2175, 0.0
      %v2192 = vmul.f32 %v2160, 1.442695
      %v2193 = vpow.pop %v2192
      %v2194 = vmul.f32 %v2161, 1.442695
      %v2195 = vpow.pop %v2194
      %v2196 = vmul.f32 %v2162, 1.442695
      %v2197 = vpow.pop %v2196
      %v2198 = vmul.f32 %v2163, 1.442695
      %v2199 = vpow.pop %v2198
      %v2200 = vmul.f32 %v2164, 1.442695
      %v2201 = vpow.pop %v2200
      %v2202 = vmul.f32 %v2165, 1.442695
      %v2203 = vpow.pop %v2202
      %v2204 = vmul.f32 %v2166, 1.442695
      %v2205 = vpow.pop %v2204
      %v2206 = vmul.f32 %v2167, 1.442695
      %v2207 = vpow.pop %v2206
      %v2208 = vmul.f32 %v2168, 1.442695
      %v2209 = vpow.pop %v2208
      %v2210 = vmul.f32 %v2169, 1.442695
      %v2211 = vpow.pop %v2210
      %v2212 = vmul.f32 %v2170, 1.442695
      %v2213 = vpow.pop %v2212
      %v2214 = vmul.f32 %v2171, 1.442695
      %v2215 = vpow.pop %v2214
      %v2216 = vmul.f32 %v2172, 1.442695
      %v2217 = vpow.pop %v2216
      %v2218 = vmul.f32 %v2173, 1.442695
      %v2219 = vpow.pop %v2218
      %v2220 = vmul.f32 %v2174, 1.442695
      %v2221 = vpow.pop %v2220
      %v2222 = vmul.f32 %v2175, 1.442695
      %v2223 = vpow.pop %v2222
      %v2224 = vsub.f32 %v2193, 1.0
      %v2225 = vsub.f32 %v2195, 1.0
      %v2226 = vsub.f32 %v2197, 1.0
      %v2227 = vsub.f32 %v2199, 1.0
      %v2228 = vsub.f32 %v2201, 1.0
      %v2229 = vsub.f32 %v2203, 1.0
      %v2230 = vsub.f32 %v2205, 1.0
      %v2231 = vsub.f32 %v2207, 1.0
      %v2232 = vsub.f32 %v2209, 1.0
      %v2233 = vsub.f32 %v2211, 1.0
      %v2234 = vsub.f32 %v2213, 1.0
      %v2235 = vsub.f32 %v2215, 1.0
      %v2236 = vsub.f32 %v2217, 1.0
      %v2237 = vsub.f32 %v2219, 1.0
      %v2238 = vsub.f32 %v2221, 1.0
      %v2239 = vsub.f32 %v2223, 1.0
      %v2240 = vsel %vm2176, %v2160, %v2224
      %v2241 = vsel %vm2177, %v2161, %v2225
      %v2242 = vsel %vm2178, %v2162, %v2226
      %v2243 = vsel %vm2179, %v2163, %v2227
      %v2244 = vsel %vm2180, %v2164, %v2228
      %v2245 = vsel %vm2181, %v2165, %v2229
      %v2246 = vsel %vm2182, %v2166, %v2230
      %v2247 = vsel %vm2183, %v2167, %v2231
      %v2248 = vsel %vm2184, %v2168, %v2232
      %v2249 = vsel %vm2185, %v2169, %v2233
      %v2250 = vsel %vm2186, %v2170, %v2234
      %v2251 = vsel %vm2187, %v2171, %v2235
      %v2252 = vsel %vm2188, %v2172, %v2236
      %v2253 = vsel %vm2189, %v2173, %v2237
      %v2254 = vsel %vm2190, %v2174, %v2238
      %v2255 = vsel %vm2191, %v2175, %v2239
      %v2256 = vpack.c.bf16 %v2240, %v2240
      %v2257 = vpack.c.bf16 %v2241, %v2241
      %v2258 = vpack.c.bf16 %v2242, %v2242
      %v2259 = vpack.c.bf16 %v2243, %v2243
      %v2260 = vpack.c.bf16 %v2244, %v2244
      %v2261 = vpack.c.bf16 %v2245, %v2245
      %v2262 = vpack.c.bf16 %v2246, %v2246
      %v2263 = vpack.c.bf16 %v2247, %v2247
      %v2264 = vpack.c.bf16 %v2248, %v2248
      %v2265 = vpack.c.bf16 %v2249, %v2249
      %v2266 = vpack.c.bf16 %v2250, %v2250
      %v2267 = vpack.c.bf16 %v2251, %v2251
      %v2268 = vpack.c.bf16 %v2252, %v2252
      %v2269 = vpack.c.bf16 %v2253, %v2253
      %v2270 = vpack.c.bf16 %v2254, %v2254
      %v2271 = vpack.c.bf16 %v2255, %v2255
      %v2272 = vld [vmem:[#allocation8] sm:$0xf]
      %v2273 = vld [vmem:[#allocation8 + $0x4] sm:$0xf]
      %v2274 = vld [vmem:[#allocation8 + $0x8] sm:$0xf]
      %v2275 = vld [vmem:[#allocation8 + $0xc] sm:$0xf]
      %v2276 = vld [vmem:[#allocation8 + $0x10] sm:$0xf]
      %v2277 = vld [vmem:[#allocation8 + $0x14] sm:$0xf]
      %v2278 = vld [vmem:[#allocation8 + $0x18] sm:$0xf]
      %v2279 = vld [vmem:[#allocation8 + $0x1c] sm:$0xf]
      %v2280 = vld [vmem:[#allocation8 + $0x20] sm:$0xf]
      %v2281 = vld [vmem:[#allocation8 + $0x24] sm:$0xf]
      %v2282 = vld [vmem:[#allocation8 + $0x28] sm:$0xf]
      %v2283 = vld [vmem:[#allocation8 + $0x2c] sm:$0xf]
      %v2284 = vld [vmem:[#allocation8 + $0x30] sm:$0xf]
      %v2285 = vld [vmem:[#allocation8 + $0x34] sm:$0xf]
      %v2286 = vld [vmem:[#allocation8 + $0x38] sm:$0xf]
      %v2287 = vld [vmem:[#allocation8 + $0x3c] sm:$0xf]
      %v2288 = vld [vmem:[%s3] sm:$0x1]
      %v2290 = vlaneseq
      %v2291 = vshrl.u32 %v2290, 7
      %v2292 = vsub.s32 0, %v2291
      %v2293 = vrot.slane %v2288, %v2292
      %v2311 = vunpack.c.l.b16 %v2256
      %v2312 = vunpack.c.l.b16 %v2257
      %v2313 = vunpack.c.l.b16 %v2258
      %v2314 = vunpack.c.l.b16 %v2259
      %v2315 = vunpack.c.l.b16 %v2260
      %v2316 = vunpack.c.l.b16 %v2261
      %v2317 = vunpack.c.l.b16 %v2262
      %v2318 = vunpack.c.l.b16 %v2263
      %v2319 = vunpack.c.l.b16 %v2264
      %v2320 = vunpack.c.l.b16 %v2265
      %v2321 = vunpack.c.l.b16 %v2266
      %v2322 = vunpack.c.l.b16 %v2267
      %v2323 = vunpack.c.l.b16 %v2268
      %v2324 = vunpack.c.l.b16 %v2269
      %v2325 = vunpack.c.l.b16 %v2270
      %v2326 = vunpack.c.l.b16 %v2271
      %v2327 = vrot.slane %v2312, 7
      %vm2328 = vcmask 1041409
      %v2329 = vsel %vm2328, %v2327, %v2311
      %v2330 = vrot.slane %v2313, 6
      %vm2331 = vcmask 1042434
      %v2332 = vsel %vm2331, %v2330, %v2329
      %v2333 = vrot.slane %v2314, 5
      %vm2334 = vcmask 1043459
      %v2335 = vsel %vm2334, %v2333, %v2332
      %v2336 = vrot.slane %v2315, 4
      %vm2337 = vcmask 1044484
      %v2338 = vsel %vm2337, %v2336, %v2335
      %v2339 = vrot.slane %v2316, 3
      %vm2340 = vcmask 1045509
      %v2341 = vsel %vm2340, %v2339, %v2338
      %v2342 = vrot.slane %v2317, 2
      %vm2343 = vcmask 1046534
      %v2344 = vsel %vm2343, %v2342, %v2341
      %v2345 = vrot.slane %v2318, 1
      %vm2346 = vcmask 1047559
      %v2347 = vsel %vm2346, %v2345, %v2344
      %v2348 = vrot.slane %v2320, 7
      %v2349 = vsel %vm2328, %v2348, %v2319
      %v2350 = vrot.slane %v2321, 6
      %v2351 = vsel %vm2331, %v2350, %v2349
      %v2352 = vrot.slane %v2322, 5
      %v2353 = vsel %vm2334, %v2352, %v2351
      %v2354 = vrot.slane %v2323, 4
      %v2355 = vsel %vm2337, %v2354, %v2353
      %v2356 = vrot.slane %v2324, 3
      %v2357 = vsel %vm2340, %v2356, %v2355
      %v2358 = vrot.slane %v2325, 2
      %v2359 = vsel %vm2343, %v2358, %v2357
      %v2360 = vrot.slane %v2326, 1
      %v2361 = vsel %vm2346, %v2360, %v2359
      %v2362 = vpack.c.b16 %v2361, %v2347
      %v2380 = vunpack.c.l.b16 %v2272
      %v2381 = vunpack.c.l.b16 %v2273
      %v2382 = vunpack.c.l.b16 %v2274
      %v2383 = vunpack.c.l.b16 %v2275
      %v2384 = vunpack.c.l.b16 %v2276
      %v2385 = vunpack.c.l.b16 %v2277
      %v2386 = vunpack.c.l.b16 %v2278
      %v2387 = vunpack.c.l.b16 %v2279
      %v2388 = vunpack.c.l.b16 %v2280
      %v2389 = vunpack.c.l.b16 %v2281
      %v2390 = vunpack.c.l.b16 %v2282
      %v2391 = vunpack.c.l.b16 %v2283
      %v2392 = vunpack.c.l.b16 %v2284
      %v2393 = vunpack.c.l.b16 %v2285
      %v2394 = vunpack.c.l.b16 %v2286
      %v2395 = vunpack.c.l.b16 %v2287
      %v2396 = vpack.c.b16 %v2381, %v2380
      %v2397 = vpack.c.b16 %v2383, %v2382
      %v2398 = vpack.c.b16 %v2385, %v2384
      %v2399 = vpack.c.b16 %v2387, %v2386
      %v2400 = vpack.c.b16 %v2389, %v2388
      %v2401 = vpack.c.b16 %v2391, %v2390
      %v2402 = vpack.c.b16 %v2393, %v2392
      %v2403 = vpack.c.b16 %v2395, %v2394
      %2412 = vmatprep.subr.bf16.mxu0 0
      %2413 = vmatpush1.bf16.msra.mxu0 %v2396
      %2414 = vmatprep.subr.bf16.mxu0 0
      %2415 = vmatpush1.bf16.msra.mxu0 %v2397
      %2416 = vmatprep.subr.bf16.mxu0 0
      %2417 = vmatpush1.bf16.msra.mxu0 %v2398
      %2418 = vmatprep.subr.bf16.mxu0 0
      %2419 = vmatpush1.bf16.msra.mxu0 %v2399
      %2420 = vmatprep.subr.bf16.mxu0 0
      %2421 = vmatpush1.bf16.msra.mxu0 %v2400
      %2422 = vmatprep.subr.bf16.mxu0 0
      %2423 = vmatpush1.bf16.msra.mxu0 %v2401
      %2424 = vmatprep.subr.bf16.mxu0 0
      %2425 = vmatpush1.bf16.msra.mxu0 %v2402
      %2426 = vmatprep.subr.bf16.mxu0 0
      %2427 = vmatpush1.bf16.msra.mxu0 %v2403
      %2428 = vmatprep.subr.bf16.mxu0 0
      %2429 = vmatpush1.bf16.msra.mxu0 0
      %2430 = vmatprep.subr.bf16.mxu0 0
      %2431 = vmatpush1.bf16.msra.mxu0 0
      %2432 = vmatprep.subr.bf16.mxu0 0
      %2433 = vmatpush1.bf16.msra.mxu0 0
      %2434 = vmatprep.subr.bf16.mxu0 0
      %2435 = vmatpush1.bf16.msra.mxu0 0
      %2436 = vmatprep.subr.bf16.mxu0 0
      %2437 = vmatpush1.bf16.msra.mxu0 0
      %2438 = vmatprep.subr.bf16.mxu0 0
      %2439 = vmatpush1.bf16.msra.mxu0 0
      %2440 = vmatprep.subr.bf16.mxu0 0
      %2441 = vmatpush1.bf16.msra.mxu0 0
      %2442 = vmatprep.subr.bf16.mxu0 0
      %2443 = vmatpush1.bf16.msra.mxu0 0
      %2444 = vmatprep.mubr.bf16.mxu0 0
      %2445 = vmatmul.mubr.bf16.gmra.mrb[0].mxu0 %v2362
      %v2446 = vpop.f32.mrb[0].mxu0
      %v2447 = vadd.f32 %v2293, %v2446
      %v2448 = vpop.f32.mrb[0].mxu0
      %v2449 = vpop.f32.mrb[0].mxu0
      %v2450 = vadd.f32 %v2293, %v2449
      %v2451 = vpop.f32.mrb[0].mxu0
      %2452 = vdwg.mxu0
      %2453 = vst [vmem:[#allocation10] sm:$0xff] %v2447
      %2454 = vst [vmem:[#allocation10 + $0x8] sm:$0xff] %v2450
    $region33: #{tpu_custom_call.1} parent=1 // pred_fallthru
      _
    // Predicated region
    $region34: #{tpu_custom_call.1} parent=1 // pred_check
      _
    $region35: #{tpu_custom_call.1} parent=1 // pred_check_branch
      %2456 = sbr.rel (0) target = $region37
    $region36: #{tpu_custom_call.1} parent=1 // pred_region
      %s2458 = ssub.s32 256, 256
      %2459 = vsyncadd [#allocation7], %s2458
      %s2460 = sshll.u32 [#allocation10], 4
      %s2461 = int_to_ptr.vmem [resolvable:$true] %s2460
      %2466 = dma.vmem_to_hbm [thread:$0]  %s2461, 256, %s4, [#allocation7], 128, 128, 8
    $region37: #{tpu_custom_call.1} parent=1 // pred_fallthru
      _
    // Predicated region
    $region38: #{tpu_custom_call.1} parent=1 // pred_check
      _
    $region39: #{tpu_custom_call.1} parent=1 // pred_check_branch
      %2468 = sbr.rel (0) target = $region41
    $region40: #{tpu_custom_call.1} parent=1 // pred_region
      %2469 = dma.done [#allocation7], 256
    $region41: #{tpu_custom_call.1} parent=1 // pred_fallthru
      _
    %2470 = vsyncpa [#allocation6], 1
    %2471 = vsyncpa [#allocation9], 1
    %2472 = vsyncpa [#allocation7], 1

</llo_original>
